<compile_context>
chip_gen: v6e
topology: v6e:2x2x1
jax: 0.10.0
libtpu: 0.0.40
codegen_flags: <defaults>
</compile_context>

<pallas_src>
import math
import functools

import jax
import jax.numpy as jnp
from jax.experimental import pallas as pl
from jax.experimental.pallas import tpu as pltpu


# ----------------------------- in-kernel helpers -----------------------------

def _layernorm(x, gamma, beta, eps=1e-6):
    # PyTorch LayerNorm (eps=1e-6 as in the module): biased variance, last dim.
    mean = jnp.mean(x, axis=-1, keepdims=True)
    var = jnp.mean(jnp.square(x - mean), axis=-1, keepdims=True)
    return (x - mean) * jax.lax.rsqrt(var + eps) * gamma + beta


def _gelu_exact(x):
    # matches torch.nn.functional.gelu (erf formulation)
    return 0.5 * x * (1.0 + jax.lax.erf(x / jnp.sqrt(2.0).astype(x.dtype)))


# --------------------------------- kernel ------------------------------------

def _encoder_kernel(x_ref, wqkv_ref, bqkv_ref, wo_ref, w1_ref, b1_ref, w2_ref,
                    small_ref, enc_ref, o_ref,
                    h_scr, qkv_scr, ctx_scr,
                    *, num_heads, seq_block, mlp_chunk):
    """One (batch, layer, seq_tile) grid step of the fused encoder.

    Grid = (B, L, S//TS); layer and seq-tile axes are innermost ("arbitrary"),
    so the residual stream for a batch element stays resident in `h_scr`
    (VMEM) across all layers and tiles.
    """
    l = pl.program_id(1)
    st = pl.program_id(2)
    n_layers = pl.num_programs(1)

    S, H = h_scr.shape
    TS = seq_block
    nh = num_heads
    hd = H // nh
    M = w1_ref.shape[-1]
    CH = mlp_chunk
    scale = 1.0 / math.sqrt(hd)

    # Load the input activation into the resident scratch at the first step.
    @pl.when((l == 0) & (st == 0))
    def _():
        h_scr[...] = x_ref[0].astype(jnp.float32)

    # Packed small per-layer params: [ln1_g, ln1_b, ln2_g, ln2_b, bo, b2]
    small = small_ref[0]                   # (6, H) f32
    ln1_g, ln1_b = small[0:1], small[1:2]
    ln2_g, ln2_b = small[2:3], small[3:4]
    bo, b2 = small[4:5], small[5:6]

    # ---- per-layer setup: fused QKV for the FULL sequence, once per layer ----
    # Bias folded into the single bf16 store; no f32 (S, 3H) value survives
    # past this block.
    @pl.when(st == 0)
    def _():
        xn_full = _layernorm(h_scr[...], ln1_g, ln1_b)
        qkv = jnp.dot(xn_full.astype(jnp.bfloat16), wqkv_ref[0],
                      preferred_element_type=jnp.float32) + bqkv_ref[0]
        qkv_scr[...] = qkv.astype(jnp.bfloat16)

    # ---------------- per-tile attention sub-block ----------------------------
    row0 = pl.multiple_of(st * TS, TS)
    x_t = h_scr[pl.ds(row0, TS), :]                 # (TS, H) f32 residual

    # Q rows for this tile (bf16, bias already folded in the scratch).
    # TODO(synk): load only the first H lanes once mixed ds+lane-slice ref
    # indexing is exercised at real shapes.
    q_all = qkv_scr[pl.ds(row0, TS), :]             # (TS, 3H) bf16

    for h in range(nh):
        q_h = q_all[:, h * hd:(h + 1) * hd]                      # (TS, hd)
        k_h = qkv_scr[:, H + h * hd:H + (h + 1) * hd]            # (S, hd)
        v_h = qkv_scr[:, 2 * H + h * hd:2 * H + (h + 1) * hd]    # (S, hd)

        s = jax.lax.dot_general(q_h, k_h, (((1,), (1,)), ((), ())),
                                preferred_element_type=jnp.float32) * scale
        s = s - jnp.max(s, axis=-1, keepdims=True)
        p = jnp.exp(s)
        p = p * pl.reciprocal(jnp.sum(p, axis=-1, keepdims=True), approx=False)

        ctx_h = jnp.dot(p.astype(jnp.bfloat16), v_h,
                        preferred_element_type=jnp.float32)      # (TS, hd)
        # Lane-dense context assembly: no concatenate, no per-head K=hd
        # out-projection matmuls.
        ctx_scr[:, h * hd:(h + 1) * hd] = ctx_h.astype(jnp.bfloat16)

    # Single full-depth (K = H) out-projection matmul.
    attn = jnp.dot(ctx_scr[...], wo_ref[0],
                   preferred_element_type=jnp.float32)           # (TS, H)
    x_t = attn + bo + x_t                                        # residual (f32)

    # ---------------- per-tile MLP sub-block (chunked over mlp_dim) -----------
    xn2 = _layernorm(x_t, ln2_g, ln2_b).astype(jnp.bfloat16)
    h2 = jnp.zeros((TS, H), jnp.float32)
    for c in range(M // CH):
        w1_c = w1_ref[0, :, c * CH:(c + 1) * CH]                 # (H, CH) bf16
        b1_c = b1_ref[0, :, c * CH:(c + 1) * CH]                 # (1, CH) f32
        h1_c = jnp.dot(xn2, w1_c, preferred_element_type=jnp.float32) + b1_c
        h1_c = _gelu_exact(h1_c)
        h2 = h2 + jnp.dot(h1_c.astype(jnp.bfloat16),
                          w2_ref[0, c * CH:(c + 1) * CH, :],
                          preferred_element_type=jnp.float32)
    x_t = h2 + b2 + x_t

    # Keep the residual stream resident for the next tile/layer.
    h_scr[pl.ds(row0, TS), :] = x_t

    # Fused final encoder LayerNorm on the last layer only.
    @pl.when(l == n_layers - 1)
    def _():
        o_ref[0, pl.ds(row0, TS), :] = _layernorm(
            x_t, enc_ref[0:1], enc_ref[1:2]).astype(o_ref.dtype)


# ------------------------------- wrappers -------------------------------------

def pack_encoder_params(raw_layers, enc_g, enc_b, num_heads):
    """Pack per-layer PyTorch-style params into stacked, kernel-friendly arrays.

    raw_layers: list of dicts with f32 arrays
      wq, wk, wv, wo: (H, H)   (pre-transposed [in, out])
      bq, bk, bv, bo: (1, H)
      w1: (H, M), b1: (1, M), w2: (M, H), b2: (1, H)
      ln1_g, ln1_b, ln2_g, ln2_b: (1, H)
    """
    del num_heads  # wo is kept un-split (single K=H out-proj matmul in-kernel)
    wqkv = jnp.stack([jnp.concatenate([p["wq"], p["wk"], p["wv"]], axis=1)
                      for p in raw_layers]).astype(jnp.bfloat16)        # (L,H,3H)
    bqkv = jnp.stack([jnp.concatenate([p["bq"], p["bk"], p["bv"]], axis=1)
                      for p in raw_layers])                              # (L,1,3H)
    wo = jnp.stack([p["wo"] for p in raw_layers]).astype(jnp.bfloat16)  # (L,H,H)
    w1 = jnp.stack([p["w1"] for p in raw_layers]).astype(jnp.bfloat16)  # (L,H,M)
    b1 = jnp.stack([p["b1"] for p in raw_layers])                        # (L,1,M)
    w2 = jnp.stack([p["w2"] for p in raw_layers]).astype(jnp.bfloat16)  # (L,M,H)
    small = jnp.stack([jnp.concatenate(
        [p["ln1_g"], p["ln1_b"], p["ln2_g"], p["ln2_b"], p["bo"], p["b2"]],
        axis=0) for p in raw_layers])                                    # (L,6,H)
    enc_ln = jnp.concatenate([enc_g, enc_b], axis=0)                     # (2,H)
    return dict(wqkv=wqkv, bqkv=bqkv, wo=wo, w1=w1, b1=b1, w2=w2,
                small=small, enc_ln=enc_ln)


def encoder_forward(hidden_states, packed, num_heads, vis=False,
                    seq_block=None, mlp_chunk=None, out_dtype=None,
                    vmem_limit_bytes=64 * 1024 * 1024):
    """Mirrors Encoder.forward: all Blocks + encoder_norm in ONE pallas_call.

    seq_block / mlp_chunk / vmem_limit_bytes are generation-specific knobs:
      v7x : seq_block~256, mlp_chunk~512, vmem_limit <= ~48 MiB
      v6e : seq_block~512-1024, mlp_chunk~1024, vmem_limit ~96 MiB
      v5e : like v6e but prioritize batch-folding weight DMA (see TODO).
    """
    B, S, H = hidden_states.shape
    L = packed["wqkv"].shape[0]
    M = packed["w1"].shape[-1]

    if out_dtype is None:
        out_dtype = hidden_states.dtype   # pass jnp.bfloat16 to halve writeback

    # Sequence tile: multiple of 8 sublanes and a divisor of S (else full S).
    if seq_block is None:
        seq_block = S if S <= 256 else 256
    if (S % seq_block != 0) or (seq_block % 8 != 0 and seq_block != S):
        seq_block = S
    n_seq_tiles = S // seq_block

    # MLP chunk over mlp_dim (bounds the (TS, M) f32 intermediate).
    if mlp_chunk is None:
        mlp_chunk = M if M <= 512 else 512
    if M % mlp_chunk != 0:
        mlp_chunk = M

    kernel = functools.partial(_encoder_kernel, num_heads=num_heads,
                               seq_block=seq_block, mlp_chunk=mlp_chunk)

    encoded = pl.pallas_call(
        kernel,
        out_shape=jax.ShapeDtypeStruct((B, S, H), out_dtype),
        grid=(B, L, n_seq_tiles),
        in_specs=[
            pl.BlockSpec((1, S, H), lambda b, l, st: (b, 0, 0)),         # x
            pl.BlockSpec((1, H, 3 * H), lambda b, l, st: (l, 0, 0)),     # wqkv
            pl.BlockSpec((1, 1, 3 * H), lambda b, l, st: (l, 0, 0)),     # bqkv
            pl.BlockSpec((1, H, H), lambda b, l, st: (l, 0, 0)),         # wo
            pl.BlockSpec((1, H, M), lambda b, l, st: (l, 0, 0)),         # w1
            pl.BlockSpec((1, 1, M), lambda b, l, st: (l, 0, 0)),         # b1
            pl.BlockSpec((1, M, H), lambda b, l, st: (l, 0, 0)),         # w2
            pl.BlockSpec((1, 6, H), lambda b, l, st: (l, 0, 0)),         # small
            pl.BlockSpec((2, H), lambda b, l, st: (0, 0)),               # enc LN
        ],
        out_specs=pl.BlockSpec((1, S, H), lambda b, l, st: (b, 0, 0)),
        scratch_shapes=[
            pltpu.VMEM((S, H), jnp.float32),            # resident residual
            pltpu.VMEM((S, 3 * H), jnp.bfloat16),       # per-layer QKV (bias in)
            pltpu.VMEM((seq_block, H), jnp.bfloat16),   # lane-dense context
        ],
        compiler_params=pltpu.CompilerParams(
            dimension_semantics=("parallel", "arbitrary", "arbitrary"),
            vmem_limit_bytes=vmem_limit_bytes),
    )(hidden_states, packed["wqkv"], packed["bqkv"], packed["wo"],
      packed["w1"], packed["b1"], packed["w2"], packed["small"],
      packed["enc_ln"])

    attn_weights = []   # vis=False -> stays empty, as in the PyTorch code
    return encoded, attn_weights


# --------------------------- reference (plain JAX, f32) -----------------------

def encoder_reference(x, raw_layers, enc_g, enc_b, num_heads):
    def block_ref(x, p):
        B, S, H = x.shape
        hd = H // num_heads
        h = x
        xn = _layernorm(x, p["ln1_g"], p["ln1_b"])
        q = xn @ p["wq"] + p["bq"]
        k = xn @ p["wk"] + p["bk"]
        v = xn @ p["wv"] + p["bv"]

        def split(t):  # (B,S,H) -> (B,nh,S,hd)
            return t.reshape(B, S, num_heads, hd).transpose(0, 2, 1, 3)

        qh, kh, vh = split(q), split(k), split(v)
        s = jnp.einsum("bhqd,bhkd->bhqk", qh, kh) / math.sqrt(hd)
        p_attn = jax.nn.softmax(s, axis=-1)
        ctx = jnp.einsum("bhqk,bhkd->bhqd", p_attn, vh)
        ctx = ctx.transpose(0, 2, 1, 3).reshape(B, S, H)
        x = ctx @ p["wo"] + p["bo"] + h
        h = x
        xn = _layernorm(x, p["ln2_g"], p["ln2_b"])
        x = _gelu_exact(xn @ p["w1"] + p["b1"]) @ p["w2"] + p["b2"] + h
        return x

    for p in raw_layers:
        x = block_ref(x, p)
    return _layernorm(x, enc_g, enc_b)


# ----------------------------------- main --------------------------------------

if __name__ == "__main__":
    # Small config consistent with the module: hidden_size=32, num_heads=4,
    # mlp_dim=64, num_layers=2; tokens B=2, S=8.
    B, S, H = 2, 8, 32
    NUM_HEADS = 4
    MLP_DIM = 64
    NUM_LAYERS = 2

    key = jax.random.PRNGKey(0)

    def init_layer(k):
        ks = jax.random.split(k, 12)
        sc = 0.1
        return dict(
            ln1_g=jnp.ones((1, H), jnp.float32),
            ln1_b=jnp.zeros((1, H), jnp.float32),
            ln2_g=jnp.ones((1, H), jnp.float32),
            ln2_b=jnp.zeros((1, H), jnp.float32),
            wq=sc * jax.random.normal(ks[0], (H, H), jnp.float32),
            wk=sc * jax.random.normal(ks[1], (H, H), jnp.float32),
            wv=sc * jax.random.normal(ks[2], (H, H), jnp.float32),
            wo=sc * jax.random.normal(ks[3], (H, H), jnp.float32),
            bq=sc * jax.random.normal(ks[4], (1, H), jnp.float32),
            bk=sc * jax.random.normal(ks[5], (1, H), jnp.float32),
            bv=sc * jax.random.normal(ks[6], (1, H), jnp.float32),
            bo=sc * jax.random.normal(ks[7], (1, H), jnp.float32),
            w1=sc * jax.random.normal(ks[8], (H, MLP_DIM), jnp.float32),
            b1=1e-6 * jax.random.normal(ks[9], (1, MLP_DIM), jnp.float32),
            w2=sc * jax.random.normal(ks[10], (MLP_DIM, H), jnp.float32),
            b2=1e-6 * jax.random.normal(ks[11], (1, H), jnp.float32),
        )

    key, *layer_keys = jax.random.split(key, NUM_LAYERS + 1)
    raw_layers = [init_layer(k) for k in layer_keys]
    enc_g = jnp.ones((1, H), jnp.float32)
    enc_b = jnp.zeros((1, H), jnp.float32)

    packed = pack_encoder_params(raw_layers, enc_g, enc_b, NUM_HEADS)

    key, xkey = jax.random.split(key)
    x = jax.random.normal(xkey, (B, S, H), jnp.float32)

    encoded, attn_weights = encoder_forward(x, packed, NUM_HEADS, vis=False)
    encoded = jax.block_until_ready(encoded)

    # Sanity check against a plain-JAX f32 reference of the same math.
    # Tolerance accounts for the bf16-operand MXU matmuls (f32 accumulation).
    ref = encoder_reference(x, raw_layers, enc_g, enc_b, NUM_HEADS)
    assert encoded.shape == (B, S, H)
    assert attn_weights == []
    max_err = float(jnp.max(jnp.abs(encoded - ref)))
    assert jnp.allclose(encoded, ref, atol=3e-2, rtol=3e-2), (
        f"mismatch vs reference: max abs diff = {max_err}")

    print("KERNEL_OK")
</pallas_src>

<mosaic_0001>
module attributes {stable_mosaic.version = 11 : i64} {
  func.func @_encoder_kernel(%arg0: i32, %arg1: i32, %arg2: i32, %arg3: memref<1x8x32xf32, #tpu.memory_space<vmem>>, %arg4: memref<1x32x96xbf16, #tpu.memory_space<vmem>>, %arg5: memref<1x1x96xf32, #tpu.memory_space<vmem>>, %arg6: memref<1x32x32xbf16, #tpu.memory_space<vmem>>, %arg7: memref<1x32x64xbf16, #tpu.memory_space<vmem>>, %arg8: memref<1x1x64xf32, #tpu.memory_space<vmem>>, %arg9: memref<1x64x32xbf16, #tpu.memory_space<vmem>>, %arg10: memref<1x6x32xf32, #tpu.memory_space<vmem>>, %arg11: memref<2x32xf32, #tpu.memory_space<vmem>>, %arg12: memref<1x8x32xf32, #tpu.memory_space<vmem>>, %arg13: memref<8x32xf32, #tpu.memory_space<vmem>>, %arg14: memref<8x96xbf16, #tpu.memory_space<vmem>>, %arg15: memref<8x32xbf16, #tpu.memory_space<vmem>>) attributes {dimension_semantics = [#tpu.dimension_semantics<parallel>, #tpu.dimension_semantics<arbitrary>, #tpu.dimension_semantics<arbitrary>], iteration_bounds = array<i64: 2, 2, 1>, scalar_prefetch = 0 : i64, scratch_operands = 3 : i64, tpu.core_type = #tpu.core_type<tc>, window_params = [{transform_indices = @transform_0, window_bounds = array<i64: 1, 8, 32>}, {transform_indices = @transform_1, window_bounds = array<i64: 1, 32, 96>}, {transform_indices = @transform_2, window_bounds = array<i64: 1, 1, 96>}, {transform_indices = @transform_3, window_bounds = array<i64: 1, 32, 32>}, {transform_indices = @transform_4, window_bounds = array<i64: 1, 32, 64>}, {transform_indices = @transform_5, window_bounds = array<i64: 1, 1, 64>}, {transform_indices = @transform_6, window_bounds = array<i64: 1, 64, 32>}, {transform_indices = @transform_7, window_bounds = array<i64: 1, 6, 32>}, {pipeline_mode = #tpu.pipeline_mode<synchronous>, transform_indices = @transform_8, window_bounds = array<i64: 2, 32>}, {transform_indices = @transform_9, window_bounds = array<i64: 1, 8, 32>}]} {
    %c0_i32 = arith.constant 0 : i32
    %0 = arith.cmpi eq, %arg1, %c0_i32 : i32
    %c0_i32_0 = arith.constant 0 : i32
    %1 = arith.cmpi eq, %arg2, %c0_i32_0 : i32
    %2 = arith.andi %0, %1 : i1
    %3 = arith.extui %2 : i1 to i32
    %c0_i32_1 = arith.constant 0 : i32
    %4 = arith.cmpi ne, %3, %c0_i32_1 : i32
    scf.if %4 {
      %c0_68 = arith.constant 0 : index
      %c0_69 = arith.constant 0 : index
      %c0_70 = arith.constant 0 : index
      %162 = vector.load %arg3[%c0_68, %c0_69, %c0_70] : memref<1x8x32xf32, #tpu.memory_space<vmem>>, vector<1x8x32xf32>
      %163 = vector.shape_cast %162 : vector<1x8x32xf32> to vector<8x32xf32>
      %c0_71 = arith.constant 0 : index
      %c0_72 = arith.constant 0 : index
      %164 = vector.load %arg13[%c0_71, %c0_72] : memref<8x32xf32, #tpu.memory_space<vmem>>, vector<8x32xf32>
      tpu.vector_store %arg13[%c0_71, %c0_72], %163 {strides = array<i32>} : memref<8x32xf32, #tpu.memory_space<vmem>>, vector<8x32xf32>,
    } else {
    }
    %c0 = arith.constant 0 : index
    %c0_2 = arith.constant 0 : index
    %c0_3 = arith.constant 0 : index
    %5 = vector.load %arg10[%c0, %c0_2, %c0_3] : memref<1x6x32xf32, #tpu.memory_space<vmem>>, vector<1x6x32xf32>
    %6 = vector.shape_cast %5 : vector<1x6x32xf32> to vector<6x32xf32>
    %7 = vector.extract_strided_slice %6 {offsets = [0, 0], sizes = [1, 32], strides = [1, 1]} : vector<6x32xf32> to vector<1x32xf32>
    %8 = vector.extract_strided_slice %6 {offsets = [1, 0], sizes = [1, 32], strides = [1, 1]} : vector<6x32xf32> to vector<1x32xf32>
    %9 = vector.extract_strided_slice %6 {offsets = [2, 0], sizes = [1, 32], strides = [1, 1]} : vector<6x32xf32> to vector<1x32xf32>
    %10 = vector.extract_strided_slice %6 {offsets = [3, 0], sizes = [1, 32], strides = [1, 1]} : vector<6x32xf32> to vector<1x32xf32>
    %11 = vector.extract_strided_slice %6 {offsets = [4, 0], sizes = [1, 32], strides = [1, 1]} : vector<6x32xf32> to vector<1x32xf32>
    %12 = vector.extract_strided_slice %6 {offsets = [5, 0], sizes = [1, 32], strides = [1, 1]} : vector<6x32xf32> to vector<1x32xf32>
    %c0_i32_4 = arith.constant 0 : i32
    %13 = arith.cmpi eq, %arg2, %c0_i32_4 : i32
    %14 = arith.extui %13 : i1 to i32
    %c0_i32_5 = arith.constant 0 : i32
    %15 = arith.cmpi ne, %14, %c0_i32_5 : i32
    scf.if %15 {
      %c0_68 = arith.constant 0 : index
      %c0_69 = arith.constant 0 : index
      %162 = vector.load %arg13[%c0_68, %c0_69] : memref<8x32xf32, #tpu.memory_space<vmem>>, vector<8x32xf32>
      %cst_70 = arith.constant dense<0.000000e+00> : vector<8xf32>
      %163 = vector.multi_reduction <add>, %162, %cst_70 [1] : vector<8x32xf32> to vector<8xf32>
      %164 = vector.shape_cast %163 : vector<8xf32> to vector<8x1xf32>
      %cst_71 = arith.constant 3.200000e+01 : f32
      %165 = vector.broadcast %cst_71 : f32 to vector<8x1xf32>
      %166 = arith.divf %164, %165 : vector<8x1xf32>
      %167 = vector.broadcast %166 : vector<8x1xf32> to vector<8x32xf32>
      %168 = arith.subf %162, %167 : vector<8x32xf32>
      %169 = arith.mulf %168, %168 : vector<8x32xf32>
      %cst_72 = arith.constant dense<0.000000e+00> : vector<8xf32>
      %170 = vector.multi_reduction <add>, %169, %cst_72 [1] : vector<8x32xf32> to vector<8xf32>
      %171 = vector.shape_cast %170 : vector<8xf32> to vector<8x1xf32>
      %cst_73 = arith.constant 3.200000e+01 : f32
      %172 = vector.broadcast %cst_73 : f32 to vector<8x1xf32>
      %173 = arith.divf %171, %172 : vector<8x1xf32>
      %174 = vector.broadcast %166 : vector<8x1xf32> to vector<8x32xf32>
      %175 = arith.subf %162, %174 : vector<8x32xf32>
      %cst_74 = arith.constant 9.99999997E-7 : f32
      %176 = vector.broadcast %cst_74 : f32 to vector<8x1xf32>
      %177 = arith.addf %173, %176 : vector<8x1xf32>
      %178 = math.rsqrt %177 : vector<8x1xf32>
      %179 = vector.broadcast %178 : vector<8x1xf32> to vector<8x32xf32>
      %180 = arith.mulf %175, %179 : vector<8x32xf32>
      %181 = vector.broadcast %7 : vector<1x32xf32> to vector<8x32xf32>
      %182 = arith.mulf %180, %181 : vector<8x32xf32>
      %183 = vector.broadcast %8 : vector<1x32xf32> to vector<8x32xf32>
      %184 = arith.addf %182, %183 : vector<8x32xf32>
      %185 = arith.truncf %184 : vector<8x32xf32> to vector<8x32xbf16>
      %c0_75 = arith.constant 0 : index
      %c0_76 = arith.constant 0 : index
      %c0_77 = arith.constant 0 : index
      %186 = vector.load %arg4[%c0_75, %c0_76, %c0_77] : memref<1x32x96xbf16, #tpu.memory_space<vmem>>, vector<1x32x96xbf16>
      %187 = vector.shape_cast %186 : vector<1x32x96xbf16> to vector<32x96xbf16>
      %cst_78 = arith.constant dense<0.000000e+00> : vector<8x96xf32>
      %188 = tpu.matmul %185, %187, %cst_78 {dimension_numbers = #tpu.dot_dimension_numbers<[1], [0], [0], [1], [0, 0, 1, 1], [], []>} : vector<8x32xbf16>, vector<32x96xbf16>, vector<8x96xf32> -> vector<8x96xf32>
      %c0_79 = arith.constant 0 : index
      %c0_80 = arith.constant 0 : index
      %c0_81 = arith.constant 0 : index
      %189 = vector.load %arg5[%c0_79, %c0_80, %c0_81] : memref<1x1x96xf32, #tpu.memory_space<vmem>>, vector<1x1x96xf32>
      %190 = vector.shape_cast %189 : vector<1x1x96xf32> to vector<1x96xf32>
      %191 = vector.broadcast %190 : vector<1x96xf32> to vector<8x96xf32>
      %192 = arith.addf %188, %191 : vector<8x96xf32>
      %193 = arith.truncf %192 : vector<8x96xf32> to vector<8x96xbf16>
      %c0_82 = arith.constant 0 : index
      %c0_83 = arith.constant 0 : index
      %194 = vector.load %arg14[%c0_82, %c0_83] : memref<8x96xbf16, #tpu.memory_space<vmem>>, vector<8x96xbf16>
      tpu.vector_store %arg14[%c0_82, %c0_83], %193 {strides = array<i32>} : memref<8x96xbf16, #tpu.memory_space<vmem>>, vector<8x96xbf16>,
    } else {
    }
    %c8_i32 = arith.constant 8 : i32
    %16 = arith.muli %arg2, %c8_i32 : i32
    %17 = tpu.assume_multiple %16, 8 : i32
    %18 = arith.index_cast %17 : i32 to index
    %c0_6 = arith.constant 0 : index
    %19 = vector.load %arg13[%18, %c0_6] : memref<8x32xf32, #tpu.memory_space<vmem>>, vector<8x32xf32>
    %20 = arith.index_cast %17 : i32 to index
    %c0_7 = arith.constant 0 : index
    %21 = vector.load %arg14[%20, %c0_7] : memref<8x96xbf16, #tpu.memory_space<vmem>>, vector<8x96xbf16>
    %22 = vector.extract_strided_slice %21 {offsets = [0, 0], sizes = [8, 8], strides = [1, 1]} : vector<8x96xbf16> to vector<8x8xbf16>
    %c0_8 = arith.constant 0 : index
    %c32 = arith.constant 32 : index
    %23 = vector.load %arg14[%c0_8, %c32] : memref<8x96xbf16, #tpu.memory_space<vmem>>, vector<8x8xbf16>
    %c0_9 = arith.constant 0 : index
    %c64 = arith.constant 64 : index
    %24 = vector.load %arg14[%c0_9, %c64] : memref<8x96xbf16, #tpu.memory_space<vmem>>, vector<8x8xbf16>
    %cst = arith.constant dense<0.000000e+00> : vector<8x8xf32>
    %25 = tpu.matmul %22, %23, %cst {dimension_numbers = #tpu.dot_dimension_numbers<[1], [1], [0], [0], [0, 0, 1, 0], [], []>} : vector<8x8xbf16>, vector<8x8xbf16>, vector<8x8xf32> -> vector<8x8xf32>
    %cst_10 = arith.constant 0.353553385 : f32
    %26 = vector.broadcast %cst_10 : f32 to vector<8x8xf32>
    %27 = arith.mulf %25, %26 : vector<8x8xf32>
    %cst_11 = arith.constant dense<0xFF800000> : vector<8xf32>
    %28 = vector.multi_reduction <maximumf>, %27, %cst_11 [1] : vector<8x8xf32> to vector<8xf32>
    %29 = vector.shape_cast %28 : vector<8xf32> to vector<8x1xf32>
    %30 = vector.broadcast %29 : vector<8x1xf32> to vector<8x8xf32>
    %31 = arith.subf %27, %30 : vector<8x8xf32>
    %32 = math.exp %31 : vector<8x8xf32>
    %cst_12 = arith.constant dense<0.000000e+00> : vector<8xf32>
    %33 = vector.multi_reduction <add>, %32, %cst_12 [1] : vector<8x8xf32> to vector<8xf32>
    %34 = vector.shape_cast %33 : vector<8xf32> to vector<8x1xf32>
    %35 = tpu.reciprocal %34 : vector<8x1xf32> -> vector<8x1xf32>
    %36 = vector.broadcast %35 : vector<8x1xf32> to vector<8x8xf32>
    %37 = arith.mulf %32, %36 : vector<8x8xf32>
    %38 = arith.truncf %37 : vector<8x8xf32> to vector<8x8xbf16>
    %cst_13 = arith.constant dense<0.000000e+00> : vector<8x8xf32>
    %39 = tpu.matmul %38, %24, %cst_13 {dimension_numbers = #tpu.dot_dimension_numbers<[1], [0], [0], [1], [0, 0, 1, 1], [], []>} : vector<8x8xbf16>, vector<8x8xbf16>, vector<8x8xf32> -> vector<8x8xf32>
    %40 = arith.truncf %39 : vector<8x8xf32> to vector<8x8xbf16>
    %c0_14 = arith.constant 0 : index
    %c0_15 = arith.constant 0 : index
    %41 = vector.load %arg15[%c0_14, %c0_15] : memref<8x32xbf16, #tpu.memory_space<vmem>>, vector<8x8xbf16>
    tpu.vector_store %arg15[%c0_14, %c0_15], %40 {strides = array<i32>} : memref<8x32xbf16, #tpu.memory_space<vmem>>, vector<8x8xbf16>,
    %42 = vector.extract_strided_slice %21 {offsets = [0, 8], sizes = [8, 8], strides = [1, 1]} : vector<8x96xbf16> to vector<8x8xbf16>
    %c0_16 = arith.constant 0 : index
    %c40 = arith.constant 40 : index
    %43 = vector.load %arg14[%c0_16, %c40] : memref<8x96xbf16, #tpu.memory_space<vmem>>, vector<8x8xbf16>
    %c0_17 = arith.constant 0 : index
    %c72 = arith.constant 72 : index
    %44 = vector.load %arg14[%c0_17, %c72] : memref<8x96xbf16, #tpu.memory_space<vmem>>, vector<8x8xbf16>
    %cst_18 = arith.constant dense<0.000000e+00> : vector<8x8xf32>
    %45 = tpu.matmul %42, %43, %cst_18 {dimension_numbers = #tpu.dot_dimension_numbers<[1], [1], [0], [0], [0, 0, 1, 0], [], []>} : vector<8x8xbf16>, vector<8x8xbf16>, vector<8x8xf32> -> vector<8x8xf32>
    %cst_19 = arith.constant 0.353553385 : f32
    %46 = vector.broadcast %cst_19 : f32 to vector<8x8xf32>
    %47 = arith.mulf %45, %46 : vector<8x8xf32>
    %cst_20 = arith.constant dense<0xFF800000> : vector<8xf32>
    %48 = vector.multi_reduction <maximumf>, %47, %cst_20 [1] : vector<8x8xf32> to vector<8xf32>
    %49 = vector.shape_cast %48 : vector<8xf32> to vector<8x1xf32>
    %50 = vector.broadcast %49 : vector<8x1xf32> to vector<8x8xf32>
    %51 = arith.subf %47, %50 : vector<8x8xf32>
    %52 = math.exp %51 : vector<8x8xf32>
    %cst_21 = arith.constant dense<0.000000e+00> : vector<8xf32>
    %53 = vector.multi_reduction <add>, %52, %cst_21 [1] : vector<8x8xf32> to vector<8xf32>
    %54 = vector.shape_cast %53 : vector<8xf32> to vector<8x1xf32>
    %55 = tpu.reciprocal %54 : vector<8x1xf32> -> vector<8x1xf32>
    %56 = vector.broadcast %55 : vector<8x1xf32> to vector<8x8xf32>
    %57 = arith.mulf %52, %56 : vector<8x8xf32>
    %58 = arith.truncf %57 : vector<8x8xf32> to vector<8x8xbf16>
    %cst_22 = arith.constant dense<0.000000e+00> : vector<8x8xf32>
    %59 = tpu.matmul %58, %44, %cst_22 {dimension_numbers = #tpu.dot_dimension_numbers<[1], [0], [0], [1], [0, 0, 1, 1], [], []>} : vector<8x8xbf16>, vector<8x8xbf16>, vector<8x8xf32> -> vector<8x8xf32>
    %60 = arith.truncf %59 : vector<8x8xf32> to vector<8x8xbf16>
    %c0_23 = arith.constant 0 : index
    %c8 = arith.constant 8 : index
    %61 = vector.load %arg15[%c0_23, %c8] : memref<8x32xbf16, #tpu.memory_space<vmem>>, vector<8x8xbf16>
    tpu.vector_store %arg15[%c0_23, %c8], %60 {strides = array<i32>} : memref<8x32xbf16, #tpu.memory_space<vmem>>, vector<8x8xbf16>,
    %62 = vector.extract_strided_slice %21 {offsets = [0, 16], sizes = [8, 8], strides = [1, 1]} : vector<8x96xbf16> to vector<8x8xbf16>
    %c0_24 = arith.constant 0 : index
    %c48 = arith.constant 48 : index
    %63 = vector.load %arg14[%c0_24, %c48] : memref<8x96xbf16, #tpu.memory_space<vmem>>, vector<8x8xbf16>
    %c0_25 = arith.constant 0 : index
    %c80 = arith.constant 80 : index
    %64 = vector.load %arg14[%c0_25, %c80] : memref<8x96xbf16, #tpu.memory_space<vmem>>, vector<8x8xbf16>
    %cst_26 = arith.constant dense<0.000000e+00> : vector<8x8xf32>
    %65 = tpu.matmul %62, %63, %cst_26 {dimension_numbers = #tpu.dot_dimension_numbers<[1], [1], [0], [0], [0, 0, 1, 0], [], []>} : vector<8x8xbf16>, vector<8x8xbf16>, vector<8x8xf32> -> vector<8x8xf32>
    %cst_27 = arith.constant 0.353553385 : f32
    %66 = vector.broadcast %cst_27 : f32 to vector<8x8xf32>
    %67 = arith.mulf %65, %66 : vector<8x8xf32>
    %cst_28 = arith.constant dense<0xFF800000> : vector<8xf32>
    %68 = vector.multi_reduction <maximumf>, %67, %cst_28 [1] : vector<8x8xf32> to vector<8xf32>
    %69 = vector.shape_cast %68 : vector<8xf32> to vector<8x1xf32>
    %70 = vector.broadcast %69 : vector<8x1xf32> to vector<8x8xf32>
    %71 = arith.subf %67, %70 : vector<8x8xf32>
    %72 = math.exp %71 : vector<8x8xf32>
    %cst_29 = arith.constant dense<0.000000e+00> : vector<8xf32>
    %73 = vector.multi_reduction <add>, %72, %cst_29 [1] : vector<8x8xf32> to vector<8xf32>
    %74 = vector.shape_cast %73 : vector<8xf32> to vector<8x1xf32>
    %75 = tpu.reciprocal %74 : vector<8x1xf32> -> vector<8x1xf32>
    %76 = vector.broadcast %75 : vector<8x1xf32> to vector<8x8xf32>
    %77 = arith.mulf %72, %76 : vector<8x8xf32>
    %78 = arith.truncf %77 : vector<8x8xf32> to vector<8x8xbf16>
    %cst_30 = arith.constant dense<0.000000e+00> : vector<8x8xf32>
    %79 = tpu.matmul %78, %64, %cst_30 {dimension_numbers = #tpu.dot_dimension_numbers<[1], [0], [0], [1], [0, 0, 1, 1], [], []>} : vector<8x8xbf16>, vector<8x8xbf16>, vector<8x8xf32> -> vector<8x8xf32>
    %80 = arith.truncf %79 : vector<8x8xf32> to vector<8x8xbf16>
    %c0_31 = arith.constant 0 : index
    %c16 = arith.constant 16 : index
    %81 = vector.load %arg15[%c0_31, %c16] : memref<8x32xbf16, #tpu.memory_space<vmem>>, vector<8x8xbf16>
    tpu.vector_store %arg15[%c0_31, %c16], %80 {strides = array<i32>} : memref<8x32xbf16, #tpu.memory_space<vmem>>, vector<8x8xbf16>,
    %82 = vector.extract_strided_slice %21 {offsets = [0, 24], sizes = [8, 8], strides = [1, 1]} : vector<8x96xbf16> to vector<8x8xbf16>
    %c0_32 = arith.constant 0 : index
    %c56 = arith.constant 56 : index
    %83 = vector.load %arg14[%c0_32, %c56] : memref<8x96xbf16, #tpu.memory_space<vmem>>, vector<8x8xbf16>
    %c0_33 = arith.constant 0 : index
    %c88 = arith.constant 88 : index
    %84 = vector.load %arg14[%c0_33, %c88] : memref<8x96xbf16, #tpu.memory_space<vmem>>, vector<8x8xbf16>
    %cst_34 = arith.constant dense<0.000000e+00> : vector<8x8xf32>
    %85 = tpu.matmul %82, %83, %cst_34 {dimension_numbers = #tpu.dot_dimension_numbers<[1], [1], [0], [0], [0, 0, 1, 0], [], []>} : vector<8x8xbf16>, vector<8x8xbf16>, vector<8x8xf32> -> vector<8x8xf32>
    %cst_35 = arith.constant 0.353553385 : f32
    %86 = vector.broadcast %cst_35 : f32 to vector<8x8xf32>
    %87 = arith.mulf %85, %86 : vector<8x8xf32>
    %cst_36 = arith.constant dense<0xFF800000> : vector<8xf32>
    %88 = vector.multi_reduction <maximumf>, %87, %cst_36 [1] : vector<8x8xf32> to vector<8xf32>
    %89 = vector.shape_cast %88 : vector<8xf32> to vector<8x1xf32>
    %90 = vector.broadcast %89 : vector<8x1xf32> to vector<8x8xf32>
    %91 = arith.subf %87, %90 : vector<8x8xf32>
    %92 = math.exp %91 : vector<8x8xf32>
    %cst_37 = arith.constant dense<0.000000e+00> : vector<8xf32>
    %93 = vector.multi_reduction <add>, %92, %cst_37 [1] : vector<8x8xf32> to vector<8xf32>
    %94 = vector.shape_cast %93 : vector<8xf32> to vector<8x1xf32>
    %95 = tpu.reciprocal %94 : vector<8x1xf32> -> vector<8x1xf32>
    %96 = vector.broadcast %95 : vector<8x1xf32> to vector<8x8xf32>
    %97 = arith.mulf %92, %96 : vector<8x8xf32>
    %98 = arith.truncf %97 : vector<8x8xf32> to vector<8x8xbf16>
    %cst_38 = arith.constant dense<0.000000e+00> : vector<8x8xf32>
    %99 = tpu.matmul %98, %84, %cst_38 {dimension_numbers = #tpu.dot_dimension_numbers<[1], [0], [0], [1], [0, 0, 1, 1], [], []>} : vector<8x8xbf16>, vector<8x8xbf16>, vector<8x8xf32> -> vector<8x8xf32>
    %100 = arith.truncf %99 : vector<8x8xf32> to vector<8x8xbf16>
    %c0_39 = arith.constant 0 : index
    %c24 = arith.constant 24 : index
    %101 = vector.load %arg15[%c0_39, %c24] : memref<8x32xbf16, #tpu.memory_space<vmem>>, vector<8x8xbf16>
    tpu.vector_store %arg15[%c0_39, %c24], %100 {strides = array<i32>} : memref<8x32xbf16, #tpu.memory_space<vmem>>, vector<8x8xbf16>,
    %c0_40 = arith.constant 0 : index
    %c0_41 = arith.constant 0 : index
    %102 = vector.load %arg15[%c0_40, %c0_41] : memref<8x32xbf16, #tpu.memory_space<vmem>>, vector<8x32xbf16>
    %c0_42 = arith.constant 0 : index
    %c0_43 = arith.constant 0 : index
    %c0_44 = arith.constant 0 : index
    %103 = vector.load %arg6[%c0_42, %c0_43, %c0_44] : memref<1x32x32xbf16, #tpu.memory_space<vmem>>, vector<1x32x32xbf16>
    %104 = vector.shape_cast %103 : vector<1x32x32xbf16> to vector<32x32xbf16>
    %cst_45 = arith.constant dense<0.000000e+00> : vector<8x32xf32>
    %105 = tpu.matmul %102, %104, %cst_45 {dimension_numbers = #tpu.dot_dimension_numbers<[1], [0], [0], [1], [0, 0, 1, 1], [], []>} : vector<8x32xbf16>, vector<32x32xbf16>, vector<8x32xf32> -> vector<8x32xf32>
    %106 = vector.broadcast %11 : vector<1x32xf32> to vector<8x32xf32>
    %107 = arith.addf %105, %106 : vector<8x32xf32>
    %108 = arith.addf %107, %19 : vector<8x32xf32>
    %cst_46 = arith.constant dense<0.000000e+00> : vector<8xf32>
    %109 = vector.multi_reduction <add>, %108, %cst_46 [1] : vector<8x32xf32> to vector<8xf32>
    %110 = vector.shape_cast %109 : vector<8xf32> to vector<8x1xf32>
    %cst_47 = arith.constant 3.200000e+01 : f32
    %111 = vector.broadcast %cst_47 : f32 to vector<8x1xf32>
    %112 = arith.divf %110, %111 : vector<8x1xf32>
    %113 = vector.broadcast %112 : vector<8x1xf32> to vector<8x32xf32>
    %114 = arith.subf %108, %113 : vector<8x32xf32>
    %115 = arith.mulf %114, %114 : vector<8x32xf32>
    %cst_48 = arith.constant dense<0.000000e+00> : vector<8xf32>
    %116 = vector.multi_reduction <add>, %115, %cst_48 [1] : vector<8x32xf32> to vector<8xf32>
    %117 = vector.shape_cast %116 : vector<8xf32> to vector<8x1xf32>
    %cst_49 = arith.constant 3.200000e+01 : f32
    %118 = vector.broadcast %cst_49 : f32 to vector<8x1xf32>
    %119 = arith.divf %117, %118 : vector<8x1xf32>
    %120 = vector.broadcast %112 : vector<8x1xf32> to vector<8x32xf32>
    %121 = arith.subf %108, %120 : vector<8x32xf32>
    %cst_50 = arith.constant 9.99999997E-7 : f32
    %122 = vector.broadcast %cst_50 : f32 to vector<8x1xf32>
    %123 = arith.addf %119, %122 : vector<8x1xf32>
    %124 = math.rsqrt %123 : vector<8x1xf32>
    %125 = vector.broadcast %124 : vector<8x1xf32> to vector<8x32xf32>
    %126 = arith.mulf %121, %125 : vector<8x32xf32>
    %127 = vector.broadcast %9 : vector<1x32xf32> to vector<8x32xf32>
    %128 = arith.mulf %126, %127 : vector<8x32xf32>
    %129 = vector.broadcast %10 : vector<1x32xf32> to vector<8x32xf32>
    %130 = arith.addf %128, %129 : vector<8x32xf32>
    %131 = arith.truncf %130 : vector<8x32xf32> to vector<8x32xbf16>
    %cst_51 = arith.constant 0.000000e+00 : f32
    %132 = vector.broadcast %cst_51 : f32 to vector<8x32xf32>
    %c0_52 = arith.constant 0 : index
    %c0_53 = arith.constant 0 : index
    %c0_54 = arith.constant 0 : index
    %133 = vector.load %arg7[%c0_52, %c0_53, %c0_54] : memref<1x32x64xbf16, #tpu.memory_space<vmem>>, vector<1x32x64xbf16>
    %134 = vector.shape_cast %133 : vector<1x32x64xbf16> to vector<32x64xbf16>
    %c0_55 = arith.constant 0 : index
    %c0_56 = arith.constant 0 : index
    %c0_57 = arith.constant 0 : index
    %135 = vector.load %arg8[%c0_55, %c0_56, %c0_57] : memref<1x1x64xf32, #tpu.memory_space<vmem>>, vector<1x1x64xf32>
    %136 = vector.shape_cast %135 : vector<1x1x64xf32> to vector<1x64xf32>
    %cst_58 = arith.constant dense<0.000000e+00> : vector<8x64xf32>
    %137 = tpu.matmul %131, %134, %cst_58 {dimension_numbers = #tpu.dot_dimension_numbers<[1], [0], [0], [1], [0, 0, 1, 1], [], []>} : vector<8x32xbf16>, vector<32x64xbf16>, vector<8x64xf32> -> vector<8x64xf32>
    %138 = vector.broadcast %136 : vector<1x64xf32> to vector<8x64xf32>
    %139 = arith.addf %137, %138 : vector<8x64xf32>
    %cst_59 = arith.constant 5.000000e-01 : f32
    %140 = vector.broadcast %cst_59 : f32 to vector<8x64xf32>
    %141 = arith.mulf %140, %139 : vector<8x64xf32>
    %cst_60 = arith.constant 2.000000e+00 : f32
    %142 = math.sqrt %cst_60 : f32
    %143 = vector.broadcast %142 : f32 to vector<8x64xf32>
    %144 = arith.divf %139, %143 : vector<8x64xf32>
    %145 = math.erf %144 : vector<8x64xf32>
    %cst_61 = arith.constant 1.000000e+00 : f32
    %146 = vector.broadcast %cst_61 : f32 to vector<8x64xf32>
    %147 = arith.addf %146, %145 : vector<8x64xf32>
    %148 = arith.mulf %141, %147 : vector<8x64xf32>
    %149 = arith.truncf %148 : vector<8x64xf32> to vector<8x64xbf16>
    %c0_62 = arith.constant 0 : index
    %c0_63 = arith.constant 0 : index
    %c0_64 = arith.constant 0 : index
    %150 = vector.load %arg9[%c0_62, %c0_63, %c0_64] : memref<1x64x32xbf16, #tpu.memory_space<vmem>>, vector<1x64x32xbf16>
    %151 = vector.shape_cast %150 : vector<1x64x32xbf16> to vector<64x32xbf16>
    %cst_65 = arith.constant dense<0.000000e+00> : vector<8x32xf32>
    %152 = tpu.matmul %149, %151, %cst_65 {dimension_numbers = #tpu.dot_dimension_numbers<[1], [0], [0], [1], [0, 0, 1, 1], [], []>} : vector<8x64xbf16>, vector<64x32xbf16>, vector<8x32xf32> -> vector<8x32xf32>
    %153 = arith.addf %132, %152 : vector<8x32xf32>
    %154 = vector.broadcast %12 : vector<1x32xf32> to vector<8x32xf32>
    %155 = arith.addf %153, %154 : vector<8x32xf32>
    %156 = arith.addf %155, %108 : vector<8x32xf32>
    %157 = arith.index_cast %17 : i32 to index
    %c0_66 = arith.constant 0 : index
    %158 = vector.load %arg13[%157, %c0_66] : memref<8x32xf32, #tpu.memory_space<vmem>>, vector<8x32xf32>
    tpu.vector_store %arg13[%157, %c0_66], %156 {strides = array<i32>} : memref<8x32xf32, #tpu.memory_space<vmem>>, vector<8x32xf32>,
    %c1_i32 = arith.constant 1 : i32
    %159 = arith.cmpi eq, %arg1, %c1_i32 : i32
    %160 = arith.extui %159 : i1 to i32
    %c0_i32_67 = arith.constant 0 : i32
    %161 = arith.cmpi ne, %160, %c0_i32_67 : i32
    scf.if %161 {
      %c0_68 = arith.constant 0 : index
      %c0_69 = arith.constant 0 : index
      %162 = vector.load %arg11[%c0_68, %c0_69] : memref<2x32xf32, #tpu.memory_space<vmem>>, vector<1x32xf32>
      %c1 = arith.constant 1 : index
      %c0_70 = arith.constant 0 : index
      %163 = vector.load %arg11[%c1, %c0_70] : memref<2x32xf32, #tpu.memory_space<vmem>>, vector<1x32xf32>
      %cst_71 = arith.constant dense<0.000000e+00> : vector<8xf32>
      %164 = vector.multi_reduction <add>, %156, %cst_71 [1] : vector<8x32xf32> to vector<8xf32>
      %165 = vector.shape_cast %164 : vector<8xf32> to vector<8x1xf32>
      %cst_72 = arith.constant 3.200000e+01 : f32
      %166 = vector.broadcast %cst_72 : f32 to vector<8x1xf32>
      %167 = arith.divf %165, %166 : vector<8x1xf32>
      %168 = vector.broadcast %167 : vector<8x1xf32> to vector<8x32xf32>
      %169 = arith.subf %156, %168 : vector<8x32xf32>
      %170 = arith.mulf %169, %169 : vector<8x32xf32>
      %cst_73 = arith.constant dense<0.000000e+00> : vector<8xf32>
      %171 = vector.multi_reduction <add>, %170, %cst_73 [1] : vector<8x32xf32> to vector<8xf32>
      %172 = vector.shape_cast %171 : vector<8xf32> to vector<8x1xf32>
      %cst_74 = arith.constant 3.200000e+01 : f32
      %173 = vector.broadcast %cst_74 : f32 to vector<8x1xf32>
      %174 = arith.divf %172, %173 : vector<8x1xf32>
      %175 = vector.broadcast %167 : vector<8x1xf32> to vector<8x32xf32>
      %176 = arith.subf %156, %175 : vector<8x32xf32>
      %cst_75 = arith.constant 9.99999997E-7 : f32
      %177 = vector.broadcast %cst_75 : f32 to vector<8x1xf32>
      %178 = arith.addf %174, %177 : vector<8x1xf32>
      %179 = math.rsqrt %178 : vector<8x1xf32>
      %180 = vector.broadcast %179 : vector<8x1xf32> to vector<8x32xf32>
      %181 = arith.mulf %176, %180 : vector<8x32xf32>
      %182 = vector.broadcast %162 : vector<1x32xf32> to vector<8x32xf32>
      %183 = arith.mulf %181, %182 : vector<8x32xf32>
      %184 = vector.broadcast %163 : vector<1x32xf32> to vector<8x32xf32>
      %185 = arith.addf %183, %184 : vector<8x32xf32>
      %c0_76 = arith.constant 0 : index
      %186 = arith.index_cast %17 : i32 to index
      %c0_77 = arith.constant 0 : index
      %187 = vector.load %arg12[%c0_76, %186, %c0_77] : memref<1x8x32xf32, #tpu.memory_space<vmem>>, vector<1x8x32xf32>
      %188 = vector.shape_cast %187 : vector<1x8x32xf32> to vector<8x32xf32>
      %189 = vector.shape_cast %185 : vector<8x32xf32> to vector<1x8x32xf32>
      tpu.vector_store %arg12[%c0_76, %186, %c0_77], %189 {strides = array<i32>} : memref<1x8x32xf32, #tpu.memory_space<vmem>>, vector<1x8x32xf32>,
    } else {
    }
    return
  }
  func.func @transform_0(%arg0: i32, %arg1: i32, %arg2: i32) -> (i32, i32, i32) {
    %c0_i32 = arith.constant 0 : i32
    %c0_i32_0 = arith.constant 0 : i32
    %c0_i32_1 = arith.constant 0 : i32
    return %arg0, %c0_i32, %c0_i32_0 : i32, i32, i32
  }
  func.func @transform_1(%arg0: i32, %arg1: i32, %arg2: i32) -> (i32, i32, i32) {
    %c0_i32 = arith.constant 0 : i32
    %c0_i32_0 = arith.constant 0 : i32
    %c0_i32_1 = arith.constant 0 : i32
    return %arg1, %c0_i32, %c0_i32_0 : i32, i32, i32
  }
  func.func @transform_2(%arg0: i32, %arg1: i32, %arg2: i32) -> (i32, i32, i32) {
    %c0_i32 = arith.constant 0 : i32
    %c0_i32_0 = arith.constant 0 : i32
    %c0_i32_1 = arith.constant 0 : i32
    return %arg1, %c0_i32, %c0_i32_0 : i32, i32, i32
  }
  func.func @transform_3(%arg0: i32, %arg1: i32, %arg2: i32) -> (i32, i32, i32) {
    %c0_i32 = arith.constant 0 : i32
    %c0_i32_0 = arith.constant 0 : i32
    %c0_i32_1 = arith.constant 0 : i32
    return %arg1, %c0_i32, %c0_i32_0 : i32, i32, i32
  }
  func.func @transform_4(%arg0: i32, %arg1: i32, %arg2: i32) -> (i32, i32, i32) {
    %c0_i32 = arith.constant 0 : i32
    %c0_i32_0 = arith.constant 0 : i32
    %c0_i32_1 = arith.constant 0 : i32
    return %arg1, %c0_i32, %c0_i32_0 : i32, i32, i32
  }
  func.func @transform_5(%arg0: i32, %arg1: i32, %arg2: i32) -> (i32, i32, i32) {
    %c0_i32 = arith.constant 0 : i32
    %c0_i32_0 = arith.constant 0 : i32
    %c0_i32_1 = arith.constant 0 : i32
    return %arg1, %c0_i32, %c0_i32_0 : i32, i32, i32
  }
  func.func @transform_6(%arg0: i32, %arg1: i32, %arg2: i32) -> (i32, i32, i32) {
    %c0_i32 = arith.constant 0 : i32
    %c0_i32_0 = arith.constant 0 : i32
    %c0_i32_1 = arith.constant 0 : i32
    return %arg1, %c0_i32, %c0_i32_0 : i32, i32, i32
  }
  func.func @transform_7(%arg0: i32, %arg1: i32, %arg2: i32) -> (i32, i32, i32) {
    %c0_i32 = arith.constant 0 : i32
    %c0_i32_0 = arith.constant 0 : i32
    %c0_i32_1 = arith.constant 0 : i32
    return %arg1, %c0_i32, %c0_i32_0 : i32, i32, i32
  }
  func.func @transform_8(%arg0: i32, %arg1: i32, %arg2: i32) -> (i32, i32) {
    %c0_i32 = arith.constant 0 : i32
    %c0_i32_0 = arith.constant 0 : i32
    %c0_i32_1 = arith.constant 0 : i32
    return %c0_i32, %c0_i32_0 : i32, i32
  }
  func.func @transform_9(%arg0: i32, %arg1: i32, %arg2: i32) -> (i32, i32, i32) {
    %c0_i32 = arith.constant 0 : i32
    %c0_i32_0 = arith.constant 0 : i32
    %c0_i32_1 = arith.constant 0 : i32
    return %arg0, %c0_i32, %c0_i32_0 : i32, i32, i32
  }
}

</mosaic_0001>

<llo_original>
// kernel: tpu_custom_call.1
$region0: #{tpu_custom_call.1}
  #allocation0 [shape = 'u32[]', space=smem, size = 0x4, offset = 0x4, fixed_abs, tag = 'smem constant byte address 0x4 - core index']
  #allocation1 [shape = 'u32[144,128]{1,0:T(1,128)}', space=vmem, size = 0x12000, scoped, tag = 'internal scratch']
  #allocation2 [shape = 'f32[8,32]{1,0:T(8,128)}', space=vmem, size = 0x1000, scoped, tag = 'scratch operand']
  #allocation3 [shape = 'bf16[8,96]{1,0:T(8,128)(2,1)}', space=vmem, size = 0x800, scoped, tag = 'scratch operand']
  #allocation4 [shape = 'bf16[8,32]{1,0:T(8,128)(2,1)}', space=vmem, size = 0x800, scoped, tag = 'scratch operand']
  %s0 = inlined_call_operand.hbm [shape: f32[2,8,32], index: 0, kind: input, shape index: {}]
  %s1 = inlined_call_operand.vmem [shape: bf16[2,32,96], index: 1, kind: input, shape index: {}]
  %s2 = inlined_call_operand.vmem [shape: f32[2,1,96], index: 2, kind: input, shape index: {}]
  %s3 = inlined_call_operand.vmem [shape: bf16[2,32,32], index: 3, kind: input, shape index: {}]
  %s4 = inlined_call_operand.vmem [shape: bf16[2,32,64], index: 4, kind: input, shape index: {}]
  %s5 = inlined_call_operand.vmem [shape: f32[2,1,64], index: 5, kind: input, shape index: {}]
  %s6 = inlined_call_operand.vmem [shape: bf16[2,64,32], index: 6, kind: input, shape index: {}]
  %s7 = inlined_call_operand.vmem [shape: f32[2,6,32], index: 7, kind: input, shape index: {}]
  %s8 = inlined_call_operand.vmem [shape: f32[2,32], index: 8, kind: input, shape index: {}]
  %s9 = inlined_call_operand.hbm [shape: f32[2,8,32], index: 9, kind: output, shape index: {}]
  %s10 = sld [smem:[#allocation0]]
  $region85: #{tpu_custom_call.1} parent=0
    _
  %s12 = ssub.s32 1, %s10
  %s13 = scalar_select 0, %s12, %s10
  $region1: #{tpu_custom_call.1} parent=0
    #allocation5 [shape = 'u8[8192]{0}', space=vmem, size = 0x2000, scoped, tag = 'input window, operand 0']
    #allocation6 [shape = 's32[2]{0}', space=sflag, size = 0x8, scoped, tag = 'scoped memory for tpu_custom_call.1']
    #allocation7 [shape = 's32[2]{0}', space=sflag, size = 0x8, scoped, tag = 'scoped memory for tpu_custom_call.1']
    #allocation8 [shape = 'u8[8192]{0}', space=vmem, size = 0x2000, scoped, tag = 'output window, operand 0']
    %14 = vsyncpa [#allocation6], 0
    %s15 = scalar_lea.sflag [#allocation6], 1
    %16 = vsyncpa %s15, 0
    %17 = vsyncpa [#allocation7], 0
    %s18 = scalar_lea.sflag [#allocation7], 1
    %19 = vsyncpa %s18, 0
    loop: start=0, step=1, limit=6
    $region2: #{tpu_custom_call.1} parent=1 // loop_pre_header
      _
    $region3: #{tpu_custom_call.1} parent=1 // loop_header
      %s21 = sphi 0, %s25
      %p22 = scmp.ge.s32.totalorder %s21, 6
      %s28 = sphi 0, %s47
      %s29 = sphi 0, %s43
      %s30 = sphi 0, %s39
      %s31 = sphi 0, %s28
      %s32 = sphi 0, %s29
      %s33 = sphi 0, %s30
      %s34 = sphi 0, %s31
      %s35 = sphi 0, %s32
      %s36 = sphi 0, %s33
      %s50 = sphi 0, %s52
      %s53 = sphi 0, %s50
      %s54 = sphi 0, %s53
      %s70 = sphi 0, %s54
      %s76 = sphi 0, %s78
      %s79 = sphi 0, %s76
      %s80 = sphi 0, %s79
      %s96 = sphi 0, %s80
      %s102 = sphi 0, %s104
      %s105 = sphi 0, %s102
      %s106 = sphi 0, %s105
      %s122 = sphi 0, %s106
      %s128 = sphi 0, %s130
      %s131 = sphi 0, %s128
      %s132 = sphi 0, %s131
      %s148 = sphi 0, %s132
      %s154 = sphi 0, %s156
      %s157 = sphi 0, %s154
      %s158 = sphi 0, %s157
      %s174 = sphi 0, %s158
      %s180 = sphi 0, %s182
      %s183 = sphi 0, %s180
      %s184 = sphi 0, %s183
      %s200 = sphi 0, %s184
      %s206 = sphi 0, %s208
      %s209 = sphi 0, %s206
      %s210 = sphi 0, %s209
      %s226 = sphi 0, %s210
      %s232 = sphi 0, %s234
      %s235 = sphi 0, %s232
      %s236 = sphi 0, %s235
      %s252 = sphi 0, %s236
      %s256 = sphi 0, %s256
      %s258 = sphi 0, %s256
      %s259 = sphi 0, %s258
      %s273 = sphi 0, %s259
      %s279 = sphi 0, %s281
      %s282 = sphi 0, %s279
      %s283 = sphi 0, %s282
      %s299 = sphi 0, %s283
    $region4: #{tpu_custom_call.1} parent=1 // loop_header_branch
      %24 = sbr.rel (%p22) target = $region8
    $region5: #{tpu_custom_call.1} parent=1 // loop_body
      %s26 = ssub.s32 %s21, 1
      %s27 = ssub.s32 %s21, 2
      %s37 = sadd.s32 1, %s30
      %p38 = scmp.ge.s32.totalorder %s37, 1
      %s39 = scalar_select %p38, 0, %s37
      %s40 = sadd.s32 1, %s29
      %s41 = scalar_select %p38, %s40, %s29
      %p42 = scmp.ge.s32.totalorder %s41, 2
      %s43 = scalar_select %p42, 0, %s41
      %s44 = sadd.s32 1, %s28
      %s45 = scalar_select %p42, %s44, %s28
      %p46 = scmp.ge.s32.totalorder %s45, 2
      %s47 = scalar_select %p46, 0, %s45
      %s48 = ssub.s32 %s28, %s47
      %p49 = scmp.eq.s32.totalorder %s48, 0
      %s51 = sadd.s32 %s50, 1
      %s52 = scalar_select %p49, %s50, %s51
      %p55 = pneg %p49
      %p56 = scmp.eq.s32.totalorder %s21, 3
      %p57 = por %p55, %p56
      %p58 = scmp.ne.s32.totalorder %s50, %s53
      %p59 = scmp.eq.s32.totalorder %s21, 0
      %p60 = por %p58, %p59
      %p61 = scmp.ne.s32.totalorder %s50, %s53
      %p62 = scmp.eq.s32.totalorder %s26, 3
      %p63 = por %p61, %p62
      %p64 = scmp.ne.s32.totalorder %s53, %s54
      %p65 = scmp.eq.s32.totalorder %s26, 0
      %p66 = por %p64, %p65
      %p67 = scmp.ne.s32.totalorder %s53, %s54
      %p68 = scmp.eq.s32.totalorder %s27, 3
      %p69 = por %p67, %p68
      %p71 = scmp.ne.s32.totalorder %s54, %s70
      %p72 = scmp.eq.s32.totalorder %s27, 0
      %p73 = por %p71, %p72
      %s74 = ssub.s32 %s29, %s43
      %p75 = scmp.eq.s32.totalorder %s74, 0
      %s77 = sadd.s32 %s76, 1
      %s78 = scalar_select %p75, %s76, %s77
      %p81 = pneg %p75
      %p82 = scmp.eq.s32.totalorder %s21, 3
      %p83 = por %p81, %p82
      %p84 = scmp.ne.s32.totalorder %s76, %s79
      %p85 = scmp.eq.s32.totalorder %s21, 0
      %p86 = por %p84, %p85
      %p87 = scmp.ne.s32.totalorder %s76, %s79
      %p88 = scmp.eq.s32.totalorder %s26, 3
      %p89 = por %p87, %p88
      %p90 = scmp.ne.s32.totalorder %s79, %s80
      %p91 = scmp.eq.s32.totalorder %s26, 0
      %p92 = por %p90, %p91
      %p93 = scmp.ne.s32.totalorder %s79, %s80
      %p94 = scmp.eq.s32.totalorder %s27, 3
      %p95 = por %p93, %p94
      %p97 = scmp.ne.s32.totalorder %s80, %s96
      %p98 = scmp.eq.s32.totalorder %s27, 0
      %p99 = por %p97, %p98
      %s100 = ssub.s32 %s29, %s43
      %p101 = scmp.eq.s32.totalorder %s100, 0
      %s103 = sadd.s32 %s102, 1
      %s104 = scalar_select %p101, %s102, %s103
      %p107 = pneg %p101
      %p108 = scmp.eq.s32.totalorder %s21, 3
      %p109 = por %p107, %p108
      %p110 = scmp.ne.s32.totalorder %s102, %s105
      %p111 = scmp.eq.s32.totalorder %s21, 0
      %p112 = por %p110, %p111
      %p113 = scmp.ne.s32.totalorder %s102, %s105
      %p114 = scmp.eq.s32.totalorder %s26, 3
      %p115 = por %p113, %p114
      %p116 = scmp.ne.s32.totalorder %s105, %s106
      %p117 = scmp.eq.s32.totalorder %s26, 0
      %p118 = por %p116, %p117
      %p119 = scmp.ne.s32.totalorder %s105, %s106
      %p120 = scmp.eq.s32.totalorder %s27, 3
      %p121 = por %p119, %p120
      %p123 = scmp.ne.s32.totalorder %s106, %s122
      %p124 = scmp.eq.s32.totalorder %s27, 0
      %p125 = por %p123, %p124
      %s126 = ssub.s32 %s29, %s43
      %p127 = scmp.eq.s32.totalorder %s126, 0
      %s129 = sadd.s32 %s128, 1
      %s130 = scalar_select %p127, %s128, %s129
      %p133 = pneg %p127
      %p134 = scmp.eq.s32.totalorder %s21, 3
      %p135 = por %p133, %p134
      %p136 = scmp.ne.s32.totalorder %s128, %s131
      %p137 = scmp.eq.s32.totalorder %s21, 0
      %p138 = por %p136, %p137
      %p139 = scmp.ne.s32.totalorder %s128, %s131
      %p140 = scmp.eq.s32.totalorder %s26, 3
      %p141 = por %p139, %p140
      %p142 = scmp.ne.s32.totalorder %s131, %s132
      %p143 = scmp.eq.s32.totalorder %s26, 0
      %p144 = por %p142, %p143
      %p145 = scmp.ne.s32.totalorder %s131, %s132
      %p146 = scmp.eq.s32.totalorder %s27, 3
      %p147 = por %p145, %p146
      %p149 = scmp.ne.s32.totalorder %s132, %s148
      %p150 = scmp.eq.s32.totalorder %s27, 0
      %p151 = por %p149, %p150
      %s152 = ssub.s32 %s29, %s43
      %p153 = scmp.eq.s32.totalorder %s152, 0
      %s155 = sadd.s32 %s154, 1
      %s156 = scalar_select %p153, %s154, %s155
      %p159 = pneg %p153
      %p160 = scmp.eq.s32.totalorder %s21, 3
      %p161 = por %p159, %p160
      %p162 = scmp.ne.s32.totalorder %s154, %s157
      %p163 = scmp.eq.s32.totalorder %s21, 0
      %p164 = por %p162, %p163
      %p165 = scmp.ne.s32.totalorder %s154, %s157
      %p166 = scmp.eq.s32.totalorder %s26, 3
      %p167 = por %p165, %p166
      %p168 = scmp.ne.s32.totalorder %s157, %s158
      %p169 = scmp.eq.s32.totalorder %s26, 0
      %p170 = por %p168, %p169
      %p171 = scmp.ne.s32.totalorder %s157, %s158
      %p172 = scmp.eq.s32.totalorder %s27, 3
      %p173 = por %p171, %p172
      %p175 = scmp.ne.s32.totalorder %s158, %s174
      %p176 = scmp.eq.s32.totalorder %s27, 0
      %p177 = por %p175, %p176
      %s178 = ssub.s32 %s29, %s43
      %p179 = scmp.eq.s32.totalorder %s178, 0
      %s181 = sadd.s32 %s180, 1
      %s182 = scalar_select %p179, %s180, %s181
      %p185 = pneg %p179
      %p186 = scmp.eq.s32.totalorder %s21, 3
      %p187 = por %p185, %p186
      %p188 = scmp.ne.s32.totalorder %s180, %s183
      %p189 = scmp.eq.s32.totalorder %s21, 0
      %p190 = por %p188, %p189
      %p191 = scmp.ne.s32.totalorder %s180, %s183
      %p192 = scmp.eq.s32.totalorder %s26, 3
      %p193 = por %p191, %p192
      %p194 = scmp.ne.s32.totalorder %s183, %s184
      %p195 = scmp.eq.s32.totalorder %s26, 0
      %p196 = por %p194, %p195
      %p197 = scmp.ne.s32.totalorder %s183, %s184
      %p198 = scmp.eq.s32.totalorder %s27, 3
      %p199 = por %p197, %p198
      %p201 = scmp.ne.s32.totalorder %s184, %s200
      %p202 = scmp.eq.s32.totalorder %s27, 0
      %p203 = por %p201, %p202
      %s204 = ssub.s32 %s29, %s43
      %p205 = scmp.eq.s32.totalorder %s204, 0
      %s207 = sadd.s32 %s206, 1
      %s208 = scalar_select %p205, %s206, %s207
      %p211 = pneg %p205
      %p212 = scmp.eq.s32.totalorder %s21, 3
      %p213 = por %p211, %p212
      %p214 = scmp.ne.s32.totalorder %s206, %s209
      %p215 = scmp.eq.s32.totalorder %s21, 0
      %p216 = por %p214, %p215
      %p217 = scmp.ne.s32.totalorder %s206, %s209
      %p218 = scmp.eq.s32.totalorder %s26, 3
      %p219 = por %p217, %p218
      %p220 = scmp.ne.s32.totalorder %s209, %s210
      %p221 = scmp.eq.s32.totalorder %s26, 0
      %p222 = por %p220, %p221
      %p223 = scmp.ne.s32.totalorder %s209, %s210
      %p224 = scmp.eq.s32.totalorder %s27, 3
      %p225 = por %p223, %p224
      %p227 = scmp.ne.s32.totalorder %s210, %s226
      %p228 = scmp.eq.s32.totalorder %s27, 0
      %p229 = por %p227, %p228
      %s230 = ssub.s32 %s29, %s43
      %p231 = scmp.eq.s32.totalorder %s230, 0
      %s233 = sadd.s32 %s232, 1
      %s234 = scalar_select %p231, %s232, %s233
      %p237 = pneg %p231
      %p238 = scmp.eq.s32.totalorder %s21, 3
      %p239 = por %p237, %p238
      %p240 = scmp.ne.s32.totalorder %s232, %s235
      %p241 = scmp.eq.s32.totalorder %s21, 0
      %p242 = por %p240, %p241
      %p243 = scmp.ne.s32.totalorder %s232, %s235
      %p244 = scmp.eq.s32.totalorder %s26, 3
      %p245 = por %p243, %p244
      %p246 = scmp.ne.s32.totalorder %s235, %s236
      %p247 = scmp.eq.s32.totalorder %s26, 0
      %p248 = por %p246, %p247
      %p249 = scmp.ne.s32.totalorder %s235, %s236
      %p250 = scmp.eq.s32.totalorder %s27, 3
      %p251 = por %p249, %p250
      %p253 = scmp.ne.s32.totalorder %s236, %s252
      %p254 = scmp.eq.s32.totalorder %s27, 0
      %p255 = por %p253, %p254
      %s257 = sadd.s32 %s256, 1
      %p260 = scmp.eq.s32.totalorder %s21, 3
      %p261 = scmp.ne.s32.totalorder %s256, %s258
      %p262 = scmp.eq.s32.totalorder %s21, 0
      %p263 = por %p261, %p262
      %p264 = scmp.ne.s32.totalorder %s256, %s258
      %p265 = scmp.eq.s32.totalorder %s26, 3
      %p266 = por %p264, %p265
      %p267 = scmp.ne.s32.totalorder %s258, %s259
      %p268 = scmp.eq.s32.totalorder %s26, 0
      %p269 = por %p267, %p268
      %p270 = scmp.ne.s32.totalorder %s258, %s259
      %p271 = scmp.eq.s32.totalorder %s27, 3
      %p272 = por %p270, %p271
      %p274 = scmp.ne.s32.totalorder %s259, %s273
      %p275 = scmp.eq.s32.totalorder %s27, 0
      %p276 = por %p274, %p275
      %s277 = ssub.s32 %s28, %s47
      %p278 = scmp.eq.s32.totalorder %s277, 0
      %s280 = sadd.s32 %s279, 1
      %s281 = scalar_select %p278, %s279, %s280
      %p284 = pneg %p278
      %p285 = scmp.eq.s32.totalorder %s21, 3
      %p286 = por %p284, %p285
      %p287 = scmp.ne.s32.totalorder %s279, %s282
      %p288 = scmp.eq.s32.totalorder %s21, 0
      %p289 = por %p287, %p288
      %p290 = scmp.ne.s32.totalorder %s279, %s282
      %p291 = scmp.eq.s32.totalorder %s26, 3
      %p292 = por %p290, %p291
      %p293 = scmp.ne.s32.totalorder %s282, %s283
      %p294 = scmp.eq.s32.totalorder %s26, 0
      %p295 = por %p293, %p294
      %p296 = scmp.ne.s32.totalorder %s282, %s283
      %p297 = scmp.eq.s32.totalorder %s27, 3
      %p298 = por %p296, %p297
      %p300 = scmp.ne.s32.totalorder %s283, %s299
      %p301 = scmp.eq.s32.totalorder %s27, 0
      %p302 = por %p300, %p301
      %p303 = scmp.le.s32.totalorder 1, %s21
      %p304 = scmp.lt.s32.totalorder %s21, 5
      %p305 = pnand %p303, %p304
      %p306 = pneg %p305
      // Predicated region
      $region9: #{tpu_custom_call.1} parent=5 // pred_check
        _
      $region10: #{tpu_custom_call.1} parent=5 // pred_check_branch
        %308 = sbr.rel (%p305) target = $region12
      $region11: #{tpu_custom_call.1} parent=5 // pred_region
        %s309 = ssub.s32 %s21, 1
        // Predicated region
        $region13: #{tpu_custom_call.1} parent=11 // pred_check
          %p310 = pneg %p269
        $region14: #{tpu_custom_call.1} parent=11 // pred_check_branch
          %312 = sbr.rel (%p310) target = $region16
        $region15: #{tpu_custom_call.1} parent=11 // pred_region
          _
        $region16: #{tpu_custom_call.1} parent=11 // pred_fallthru
          _
      $region12: #{tpu_custom_call.1} parent=5 // pred_fallthru
        _
      %p313 = scmp.lt.s32.totalorder %s21, 4
      // Predicated region
      $region17: #{tpu_custom_call.1} parent=5 // pred_check
        %p314 = pneg %p313
      $region18: #{tpu_custom_call.1} parent=5 // pred_check_branch
        %316 = sbr.rel (%p314) target = $region20
      $region19: #{tpu_custom_call.1} parent=5 // pred_region
        // Predicated region
        $region21: #{tpu_custom_call.1} parent=19 // pred_check
          %p317 = pneg %p60
        $region22: #{tpu_custom_call.1} parent=19 // pred_check_branch
          %319 = sbr.rel (%p317) target = $region24
        $region23: #{tpu_custom_call.1} parent=19 // pred_region
          %s320 = sand.u32 %s50, 1
          %s321 = scalar_lea.sflag [#allocation6], %s320
          %s322 = sand.u32 %s50, 1
          %s323 = smul.addr %s322, 8
          %s324 = scalar_lea.vmem [#allocation5], %s323
          %s326 = ssub.s32 128, 128
          %327 = vsyncadd %s321, %s326
          %s328 = smul.addr %s28, 128
          %s329 = scalar_lea.hbm %s0, %s328
          %s331 = sshll.u32 %s324, 4
          %s332 = int_to_ptr.vmem [resolvable:$true] %s331
          %334 = dma.hbm_to_vmem [thread:$0]  %s329, 128, %s332, %s321
        $region24: #{tpu_custom_call.1} parent=19 // pred_fallthru
          _
        // Predicated region
        $region25: #{tpu_custom_call.1} parent=19 // pred_check
          %p335 = pneg %p86
        $region26: #{tpu_custom_call.1} parent=19 // pred_check_branch
          %337 = sbr.rel (%p335) target = $region28
        $region27: #{tpu_custom_call.1} parent=19 // pred_region
          %p338 = scmp.lt.s32.totalorder %s29, 1
          %s339 = scalar_select %p338, %s29, 1
          %s340 = smul.addr %s339, 4
          %s341 = smul.addr %s340, 4
          %s342 = scalar_lea.vmem %s1, %s341
        $region28: #{tpu_custom_call.1} parent=19 // pred_fallthru
          _
        // Predicated region
        $region29: #{tpu_custom_call.1} parent=19 // pred_check
          %p343 = pneg %p112
        $region30: #{tpu_custom_call.1} parent=19 // pred_check_branch
          %345 = sbr.rel (%p343) target = $region32
        $region31: #{tpu_custom_call.1} parent=19 // pred_region
          %p346 = scmp.lt.s32.totalorder %s29, 1
          %s347 = scalar_select %p346, %s29, 1
          %s348 = scalar_lea.vmem %s2, %s347
        $region32: #{tpu_custom_call.1} parent=19 // pred_fallthru
          _
        // Predicated region
        $region33: #{tpu_custom_call.1} parent=19 // pred_check
          %p349 = pneg %p138
        $region34: #{tpu_custom_call.1} parent=19 // pred_check_branch
          %351 = sbr.rel (%p349) target = $region36
        $region35: #{tpu_custom_call.1} parent=19 // pred_region
          %p352 = scmp.lt.s32.totalorder %s29, 1
          %s353 = scalar_select %p352, %s29, 1
          %s354 = smul.addr %s353, 4
          %s355 = smul.addr %s354, 4
          %s356 = scalar_lea.vmem %s3, %s355
        $region36: #{tpu_custom_call.1} parent=19 // pred_fallthru
          _
        // Predicated region
        $region37: #{tpu_custom_call.1} parent=19 // pred_check
          %p357 = pneg %p164
        $region38: #{tpu_custom_call.1} parent=19 // pred_check_branch
          %359 = sbr.rel (%p357) target = $region40
        $region39: #{tpu_custom_call.1} parent=19 // pred_region
          %p360 = scmp.lt.s32.totalorder %s29, 1
          %s361 = scalar_select %p360, %s29, 1
          %s362 = smul.addr %s361, 4
          %s363 = smul.addr %s362, 4
          %s364 = scalar_lea.vmem %s4, %s363
        $region40: #{tpu_custom_call.1} parent=19 // pred_fallthru
          _
        // Predicated region
        $region41: #{tpu_custom_call.1} parent=19 // pred_check
          %p365 = pneg %p190
        $region42: #{tpu_custom_call.1} parent=19 // pred_check_branch
          %367 = sbr.rel (%p365) target = $region44
        $region43: #{tpu_custom_call.1} parent=19 // pred_region
          %p368 = scmp.lt.s32.totalorder %s29, 1
          %s369 = scalar_select %p368, %s29, 1
          %s370 = scalar_lea.vmem %s5, %s369
        $region44: #{tpu_custom_call.1} parent=19 // pred_fallthru
          _
        // Predicated region
        $region45: #{tpu_custom_call.1} parent=19 // pred_check
          %p371 = pneg %p216
        $region46: #{tpu_custom_call.1} parent=19 // pred_check_branch
          %373 = sbr.rel (%p371) target = $region48
        $region47: #{tpu_custom_call.1} parent=19 // pred_region
          %p374 = scmp.lt.s32.totalorder %s29, 1
          %s375 = scalar_select %p374, %s29, 1
          %s376 = smul.addr %s375, 8
          %s377 = smul.addr %s376, 4
          %s378 = scalar_lea.vmem %s6, %s377
        $region48: #{tpu_custom_call.1} parent=19 // pred_fallthru
          _
        // Predicated region
        $region49: #{tpu_custom_call.1} parent=19 // pred_check
          %p379 = pneg %p242
        $region50: #{tpu_custom_call.1} parent=19 // pred_check_branch
          %381 = sbr.rel (%p379) target = $region52
        $region51: #{tpu_custom_call.1} parent=19 // pred_region
          %p382 = scmp.lt.s32.totalorder %s29, 1
          %s383 = scalar_select %p382, %s29, 1
          %s384 = smul.addr %s383, 8
          %s385 = scalar_lea.vmem %s7, %s384
        $region52: #{tpu_custom_call.1} parent=19 // pred_fallthru
          _
      $region20: #{tpu_custom_call.1} parent=5 // pred_fallthru
        _
      %p386 = scmp.le.s32.totalorder 1, %s21
      %p387 = scmp.lt.s32.totalorder %s21, 5
      %p388 = pnand %p386, %p387
      %p389 = pneg %p388
      // Predicated region
      $region53: #{tpu_custom_call.1} parent=5 // pred_check
        _
      $region54: #{tpu_custom_call.1} parent=5 // pred_check_branch
        %391 = sbr.rel (%p388) target = $region56
      $region55: #{tpu_custom_call.1} parent=5 // pred_region
        %s392 = ssub.s32 %s21, 1
        %s393 = sand.u32 %s53, 1
        %s394 = scalar_lea.sflag [#allocation6], %s393
        %s395 = sand.u32 %s53, 1
        %s396 = smul.addr %s395, 8
        %s397 = scalar_lea.vmem [#allocation5], %s396
        // Predicated region
        $region57: #{tpu_custom_call.1} parent=55 // pred_check
          %p398 = pneg %p66
        $region58: #{tpu_custom_call.1} parent=55 // pred_check_branch
          %400 = sbr.rel (%p398) target = $region60
        $region59: #{tpu_custom_call.1} parent=55 // pred_region
          %401 = dma.done %s394, 128
        $region60: #{tpu_custom_call.1} parent=55 // pred_fallthru
          _
        %s402 = sand.u32 %s53, 1
        %s403 = scalar_lea.sflag [#allocation6], %s402
        %s404 = sand.u32 %s53, 1
        %s405 = smul.addr %s404, 8
        %s406 = scalar_lea.vmem [#allocation5], %s405
        %p407 = pneg %p66
        %p408 = pneg %p63
        %p409 = scmp.lt.s32.totalorder %s32, 1
        %s410 = scalar_select %p409, %s32, 1
        %s411 = smul.addr %s410, 4
        %s412 = smul.addr %s411, 4
        %s413 = scalar_lea.vmem %s1, %s412
        %p414 = pneg %p92
        %p415 = pneg %p89
        %p416 = scmp.lt.s32.totalorder %s32, 1
        %s417 = scalar_select %p416, %s32, 1
        %s418 = scalar_lea.vmem %s2, %s417
        %p419 = pneg %p118
        %p420 = pneg %p115
        %p421 = scmp.lt.s32.totalorder %s32, 1
        %s422 = scalar_select %p421, %s32, 1
        %s423 = smul.addr %s422, 4
        %s424 = smul.addr %s423, 4
        %s425 = scalar_lea.vmem %s3, %s424
        %p426 = pneg %p144
        %p427 = pneg %p141
        %p428 = scmp.lt.s32.totalorder %s32, 1
        %s429 = scalar_select %p428, %s32, 1
        %s430 = smul.addr %s429, 4
        %s431 = smul.addr %s430, 4
        %s432 = scalar_lea.vmem %s4, %s431
        %p433 = pneg %p170
        %p434 = pneg %p167
        %p435 = scmp.lt.s32.totalorder %s32, 1
        %s436 = scalar_select %p435, %s32, 1
        %s437 = scalar_lea.vmem %s5, %s436
        %p438 = pneg %p196
        %p439 = pneg %p193
        %p440 = scmp.lt.s32.totalorder %s32, 1
        %s441 = scalar_select %p440, %s32, 1
        %s442 = smul.addr %s441, 8
        %s443 = smul.addr %s442, 4
        %s444 = scalar_lea.vmem %s6, %s443
        %p445 = pneg %p222
        %p446 = pneg %p219
        %p447 = scmp.lt.s32.totalorder %s32, 1
        %s448 = scalar_select %p447, %s32, 1
        %s449 = smul.addr %s448, 8
        %s450 = scalar_lea.vmem %s7, %s449
        %p451 = pneg %p248
        %p452 = pneg %p245
        %p453 = pneg %p269
        %p454 = pneg %p266
        %p455 = pneg %p295
        %p456 = pneg %p292
        %s457 = sand.u32 %s282, 1
        %s458 = scalar_lea.sflag [#allocation7], %s457
        %s459 = sand.u32 %s282, 1
        %s460 = smul.addr %s459, 8
        %s461 = scalar_lea.vmem [#allocation8], %s460
        %p462 = scmp.lt.s32.totalorder %s32, 1
        %s463 = scalar_select %p462, %s32, 1
        %s464 = smul.addr %s463, 4
        %s465 = smul.addr %s464, 4
        %s466 = scalar_lea.vmem %s1, %s465
        %p467 = scmp.lt.s32.totalorder %s32, 1
        %s468 = scalar_select %p467, %s32, 1
        %s469 = scalar_lea.vmem %s2, %s468
        %p470 = scmp.lt.s32.totalorder %s32, 1
        %s471 = scalar_select %p470, %s32, 1
        %s472 = smul.addr %s471, 4
        %s473 = smul.addr %s472, 4
        %s474 = scalar_lea.vmem %s3, %s473
        %p475 = scmp.lt.s32.totalorder %s32, 1
        %s476 = scalar_select %p475, %s32, 1
        %s477 = smul.addr %s476, 4
        %s478 = smul.addr %s477, 4
        %s479 = scalar_lea.vmem %s4, %s478
        %p480 = scmp.lt.s32.totalorder %s32, 1
        %s481 = scalar_select %p480, %s32, 1
        %s482 = scalar_lea.vmem %s5, %s481
        %p483 = scmp.lt.s32.totalorder %s32, 1
        %s484 = scalar_select %p483, %s32, 1
        %s485 = smul.addr %s484, 8
        %s486 = smul.addr %s485, 4
        %s487 = scalar_lea.vmem %s6, %s486
        %p488 = scmp.lt.s32.totalorder %s32, 1
        %s489 = scalar_select %p488, %s32, 1
        %s490 = smul.addr %s489, 8
        %s491 = scalar_lea.vmem %s7, %s490
        %p493 = scmp.eq.s32.totalorder %s32, 0
        %p494 = scmp.eq.s32.totalorder %s33, 0
        %p495 = pnand %p493, %p494
        %p496 = pneg %p495
        // Predicated region
        $region61: #{tpu_custom_call.1} parent=55 // pred_check
          _
        $region62: #{tpu_custom_call.1} parent=55 // pred_check_branch
          %498 = sbr.rel (%p495) target = $region64
        $region63: #{tpu_custom_call.1} parent=55 // pred_region
          %v499 = vld [vmem:[%s397] sm:$0xff]
          %vm500 = vcmask 261120
          %501 = vst.msk [vmem:[#allocation2] sm:$0xff] %vm500, %v499
        $region64: #{tpu_custom_call.1} parent=55 // pred_fallthru
          _
        %v502 = vld [vmem:[%s491] sm:$0x3f]
        // Predicated region
        $region65: #{tpu_custom_call.1} parent=55 // pred_check
          %p503 = pneg %p494
        $region66: #{tpu_custom_call.1} parent=55 // pred_check_branch
          %505 = sbr.rel (%p503) target = $region68
        $region67: #{tpu_custom_call.1} parent=55 // pred_region
          %v506 = vld [vmem:[#allocation2] sm:$0xff]
          %vm507 = vcmask 261120
          %v508 = vsel %vm507, %v506, 0.0
          %509 = vadd.xlane.f32.xlu0 %v508
          %v510 = vpop.xlane.xlu0 %509
          %v511 = vrcp.pop 32.0
          %v512 = vmul.f32 %v510, %v511
          %v513 = vsub.f32 %v506, %v512
          %v514 = vmul.f32 %v513, %v513
          %v515 = vsel %vm507, %v514, 0.0
          %516 = vadd.xlane.f32.xlu0 %v515
          %v517 = vpop.xlane.xlu0 %516
          %v518 = vmul.f32 %v517, %v511
          %v519 = vadd.f32 %v518, 1e-06
          %v520 = vrsqrt.pop %v519
          %v521 = vmul.f32 %v513, %v520
          %v522 = vlaneseq
          %v523 = vshrl.u32 %v522, 7
          %v524 = vsub.s32 0, %v523
          %v525 = vrot.slane %v502, %v524
          %v526 = vmul.f32 %v521, %v525
          %v527 = vlaneseq
          %v528 = vshrl.u32 %v527, 7
          %v529 = vsub.s32 1, %v528
          %v530 = vrot.slane %v502, %v529
          %v531 = vadd.f32 %v526, %v530
          %v532 = vpack.c.bf16 %v531, %v531
          %v533 = vld [vmem:[%s466] sm:$0xf]
          %v534 = vld [vmem:[%s466 + $0x4] sm:$0xf]
          %v535 = vld [vmem:[%s466 + $0x8] sm:$0xf]
          %v536 = vld [vmem:[%s466 + $0xc] sm:$0xf]
          %v537 = vld [vmem:[%s469] sm:$0x1]
          %v539 = vlaneseq
          %v540 = vshrl.u32 %v539, 7
          %v541 = vsub.s32 0, %v540
          %v542 = vrot.slane %v537, %v541
          %v548 = vunpack.c.l.b16 %v533
          %v549 = vunpack.c.l.b16 %v534
          %v550 = vunpack.c.l.b16 %v535
          %v551 = vunpack.c.l.b16 %v536
          %v552 = vpack.c.b16 %v549, %v548
          %v553 = vpack.c.b16 %v551, %v550
          %v557 = vsel %vm507, %v532, 0
          %559 = vmatprep.subr.bf16.mxu0 0
          %560 = vmatpush1.bf16.msra.mxu0 0
          %561 = vmatprep.subr.bf16.mxu0 0
          %562 = vmatpush1.bf16.msra.mxu0 0
          %563 = vmatprep.subr.bf16.mxu0 0
          %564 = vmatpush1.bf16.msra.mxu0 0
          %565 = vmatprep.subr.bf16.mxu0 0
          %566 = vmatpush1.bf16.msra.mxu0 0
          %567 = vmatprep.subr.bf16.mxu0 0
          %568 = vmatpush1.bf16.msra.mxu0 0
          %569 = vmatprep.subr.bf16.mxu0 0
          %570 = vmatpush1.bf16.msra.mxu0 0
          %571 = vmatprep.subr.bf16.mxu0 0
          %572 = vmatpush1.bf16.msra.mxu0 %v553
          %573 = vmatprep.subr.bf16.mxu0 0
          %574 = vmatpush1.bf16.msra.mxu0 %v552
          %575 = vmatprep.subr.bf16.mxu0 0
          %576 = vmatpush2.bf16.msra.mxu0 0
          %577 = vmatprep.subr.bf16.mxu0 0
          %578 = vmatpush2.bf16.msra.mxu0 0
          %579 = vmatprep.subr.bf16.mxu0 0
          %580 = vmatpush2.bf16.msra.mxu0 0
          %581 = vmatprep.subr.bf16.mxu0 0
          %582 = vmatpush2.bf16.msra.mxu0 0
          %583 = vmatprep.subr.bf16.mxu0 0
          %584 = vmatpush2.bf16.msra.mxu0 0
          %585 = vmatprep.subr.bf16.mxu0 0
          %586 = vmatpush2.bf16.msra.mxu0 0
          %587 = vmatprep.subr.bf16.mxu0 0
          %588 = vmatpush2.bf16.msra.mxu0 0
          %589 = vmatprep.subr.bf16.mxu0 0
          %590 = vmatpush2.bf16.msra.mxu0 0
          %591 = vmatprep.mubr.bf16.mxu0 0
          %592 = vmatmul.mubr.bf16.gmra.mxu0 %v557
          %v593 = vpop.f32.mrf.mxu0
          %v594 = vadd.f32 %v542, %v593
          %v595 = vpop.f32.mrf.mxu0
          %v596 = vpop.f32.mrf.mxu0
          %v597 = vpop.f32.mrf.mxu0
          %598 = vdwg.mxu0
          %v599 = vpack.c.bf16 %v594, %v594
          %vm600 = vcmask 781312
          %601 = vst.msk [vmem:[#allocation3] sm:$0xf] %vm600, %v599
        $region68: #{tpu_custom_call.1} parent=55 // pred_fallthru
          _
        %s602 = smul.u32 %s33, 8
        %s603 = scalar_lea.vmem [#allocation2], %s602
        %v604 = vld [vmem:[%s603] sm:$0xff]
        %s605 = sshra.s32 %s602, 3
        %s606 = sand.u32 %s602, 7
        %s607 = smul.addr %s605, 4
        %s608 = scalar_lea.vmem [#allocation3], %s607
        %v609 = vld [vmem:[%s608] sm:$0xf]
        %v610 = vld [vmem:[#allocation3] sm:$0xf]
        %v612 = vunpack.c.l.b16 %v610
        %v613 = vpack.c.b16 %v612, %v612
        %614 = vrot.lane.b32.xlu0 %v613, 96
        %v615 = vpop.permute.xlu0 %614
        %vm616 = vcmask 64512
        %v618 = vsel %vm616, %v609, 0
        %v621 = vsel %vm616, %v615, 0
        %623 = vmatprep.subr.bf16.mxu0 0
        %624 = vmatpush1.bf16.xpose.msra.mxu0 0
        %625 = vmatprep.subr.bf16.mxu0 0
        %626 = vmatpush1.bf16.xpose.msra.mxu0 0
        %627 = vmatprep.subr.bf16.mxu0 0
        %628 = vmatpush1.bf16.xpose.msra.mxu0 0
        %629 = vmatprep.subr.bf16.mxu0 0
        %630 = vmatpush1.bf16.xpose.msra.mxu0 0
        %631 = vmatprep.subr.bf16.mxu0 0
        %632 = vmatpush1.bf16.xpose.msra.mxu0 0
        %633 = vmatprep.subr.bf16.mxu0 0
        %634 = vmatpush1.bf16.xpose.msra.mxu0 0
        %635 = vmatprep.subr.bf16.mxu0 0
        %636 = vmatpush1.bf16.xpose.msra.mxu0 0
        %637 = vmatprep.subr.bf16.mxu0 0
        %638 = vmatpush1.bf16.xpose.msra.mxu0 %v621
        %639 = vmatprep.subr.bf16.mxu0 0
        %640 = vmatpush2.bf16.xpose.msra.mxu0 0
        %641 = vmatprep.subr.bf16.mxu0 0
        %642 = vmatpush2.bf16.xpose.msra.mxu0 0
        %643 = vmatprep.subr.bf16.mxu0 0
        %644 = vmatpush2.bf16.xpose.msra.mxu0 0
        %645 = vmatprep.subr.bf16.mxu0 0
        %646 = vmatpush2.bf16.xpose.msra.mxu0 0
        %647 = vmatprep.subr.bf16.mxu0 0
        %648 = vmatpush2.bf16.xpose.msra.mxu0 0
        %649 = vmatprep.subr.bf16.mxu0 0
        %650 = vmatpush2.bf16.xpose.msra.mxu0 0
        %651 = vmatprep.subr.bf16.mxu0 0
        %652 = vmatpush2.bf16.xpose.msra.mxu0 0
        %653 = vmatprep.subr.bf16.mxu0 0
        %654 = vmatpush2.bf16.xpose.msra.mxu0 0
        %655 = vmatprep.mubr.bf16.mxu0 0
        %656 = vmatmul.mubr.bf16.gmra.mxu0 %v618
        %v657 = vpop.f32.mrf.mxu0
        %v658 = vadd.f32 0.0, %v657
        %v659 = vpop.f32.mrf.mxu0
        %v660 = vpop.f32.mrf.mxu0
        %v661 = vpop.f32.mrf.mxu0
        %662 = vdwg.mxu0
        %v663 = vmul.f32 %v658, 0.35355338
        %v664 = vsel %vm616, %v663, -inf
        %665 = vmax.xlane.f32.xlu0 %v664
        %v666 = vpop.xlane.xlu0 %665
        %v667 = vsub.f32 %v663, %v666
        %v668 = vmul.f32 %v667, 1.442695
        %v669 = vpow.pop %v668
        %v670 = vsel %vm616, %v669, 0.0
        %671 = vadd.xlane.f32.xlu0 %v670
        %v672 = vpop.xlane.xlu0 %671
        %v673 = vrcp.pop %v672
        %v674 = vmul.f32 %v669, %v673
        %v675 = vpack.c.bf16 %v674, %v674
        %676 = vrot.lane.b32.xlu0 %v613, 64
        %v677 = vpop.permute.xlu0 %676
        %v679 = vsel %vm616, %v675, 0
        %vm681 = vcmask 1043456
        %v683 = vsel %vm681, %v677, 0
        %685 = vmatprep.subr.bf16.mxu0 0
        %686 = vmatpush1.bf16.msra.mxu0 0
        %687 = vmatprep.subr.bf16.mxu0 0
        %688 = vmatpush1.bf16.msra.mxu0 0
        %689 = vmatprep.subr.bf16.mxu0 0
        %690 = vmatpush1.bf16.msra.mxu0 0
        %691 = vmatprep.subr.bf16.mxu0 0
        %692 = vmatpush1.bf16.msra.mxu0 0
        %693 = vmatprep.subr.bf16.mxu0 0
        %694 = vmatpush1.bf16.msra.mxu0 0
        %695 = vmatprep.subr.bf16.mxu0 0
        %696 = vmatpush1.bf16.msra.mxu0 0
        %697 = vmatprep.subr.bf16.mxu0 0
        %698 = vmatpush1.bf16.msra.mxu0 0
        %699 = vmatprep.subr.bf16.mxu0 0
        %700 = vmatpush1.bf16.msra.mxu0 %v683
        %701 = vmatprep.subr.bf16.mxu0 0
        %702 = vmatpush2.bf16.msra.mxu0 0
        %703 = vmatprep.subr.bf16.mxu0 0
        %704 = vmatpush2.bf16.msra.mxu0 0
        %705 = vmatprep.subr.bf16.mxu0 0
        %706 = vmatpush2.bf16.msra.mxu0 0
        %707 = vmatprep.subr.bf16.mxu0 0
        %708 = vmatpush2.bf16.msra.mxu0 0
        %709 = vmatprep.subr.bf16.mxu0 0
        %710 = vmatpush2.bf16.msra.mxu0 0
        %711 = vmatprep.subr.bf16.mxu0 0
        %712 = vmatpush2.bf16.msra.mxu0 0
        %713 = vmatprep.subr.bf16.mxu0 0
        %714 = vmatpush2.bf16.msra.mxu0 0
        %715 = vmatprep.subr.bf16.mxu0 0
        %716 = vmatpush2.bf16.msra.mxu0 0
        %717 = vmatprep.mubr.bf16.mxu0 0
        %718 = vmatmul.mubr.bf16.gmra.mxu0 %v679
        %v719 = vpop.f32.mrf.mxu0
        %v720 = vadd.f32 0.0, %v719
        %v721 = vpop.f32.mrf.mxu0
        %v722 = vpop.f32.mrf.mxu0
        %v723 = vpop.f32.mrf.mxu0
        %724 = vdwg.mxu0
        %v725 = vpack.c.bf16 %v720, %v720
        %vm726 = vcmask 60416
        %727 = vst.msk [vmem:[#allocation4] sm:$0xf] %vm726, %v725
        %v728 = vld [vmem:[#allocation3] sm:$0xf]
        %v730 = vunpack.c.l.b16 %v609
        %v731 = vpack.c.b16 %v730, %v730
        %732 = vrot.lane.b32.xlu0 %v731, 120
        %v733 = vpop.permute.xlu0 %732
        %v735 = vunpack.c.l.b16 %v728
        %v736 = vpack.c.b16 %v735, %v735
        %737 = vrot.lane.b32.xlu0 %v736, 88
        %v738 = vpop.permute.xlu0 %737
        %v740 = vsel %vm616, %v733, 0
        %v743 = vsel %vm616, %v738, 0
        %745 = vmatprep.subr.bf16.mxu0 0
        %746 = vmatpush1.bf16.xpose.msra.mxu0 0
        %747 = vmatprep.subr.bf16.mxu0 0
        %748 = vmatpush1.bf16.xpose.msra.mxu0 0
        %749 = vmatprep.subr.bf16.mxu0 0
        %750 = vmatpush1.bf16.xpose.msra.mxu0 0
        %751 = vmatprep.subr.bf16.mxu0 0
        %752 = vmatpush1.bf16.xpose.msra.mxu0 0
        %753 = vmatprep.subr.bf16.mxu0 0
        %754 = vmatpush1.bf16.xpose.msra.mxu0 0
        %755 = vmatprep.subr.bf16.mxu0 0
        %756 = vmatpush1.bf16.xpose.msra.mxu0 0
        %757 = vmatprep.subr.bf16.mxu0 0
        %758 = vmatpush1.bf16.xpose.msra.mxu0 0
        %759 = vmatprep.subr.bf16.mxu0 0
        %760 = vmatpush1.bf16.xpose.msra.mxu0 %v743
        %761 = vmatprep.subr.bf16.mxu0 0
        %762 = vmatpush2.bf16.xpose.msra.mxu0 0
        %763 = vmatprep.subr.bf16.mxu0 0
        %764 = vmatpush2.bf16.xpose.msra.mxu0 0
        %765 = vmatprep.subr.bf16.mxu0 0
        %766 = vmatpush2.bf16.xpose.msra.mxu0 0
        %767 = vmatprep.subr.bf16.mxu0 0
        %768 = vmatpush2.bf16.xpose.msra.mxu0 0
        %769 = vmatprep.subr.bf16.mxu0 0
        %770 = vmatpush2.bf16.xpose.msra.mxu0 0
        %771 = vmatprep.subr.bf16.mxu0 0
        %772 = vmatpush2.bf16.xpose.msra.mxu0 0
        %773 = vmatprep.subr.bf16.mxu0 0
        %774 = vmatpush2.bf16.xpose.msra.mxu0 0
        %775 = vmatprep.subr.bf16.mxu0 0
        %776 = vmatpush2.bf16.xpose.msra.mxu0 0
        %777 = vmatprep.mubr.bf16.mxu0 0
        %778 = vmatmul.mubr.bf16.gmra.mxu0 %v740
        %v779 = vpop.f32.mrf.mxu0
        %v780 = vadd.f32 0.0, %v779
        %v781 = vpop.f32.mrf.mxu0
        %v782 = vpop.f32.mrf.mxu0
        %v783 = vpop.f32.mrf.mxu0
        %784 = vdwg.mxu0
        %v785 = vmul.f32 %v780, 0.35355338
        %v786 = vsel %vm616, %v785, -inf
        %787 = vmax.xlane.f32.xlu0 %v786
        %v788 = vpop.xlane.xlu0 %787
        %v789 = vsub.f32 %v785, %v788
        %v790 = vmul.f32 %v789, 1.442695
        %v791 = vpow.pop %v790
        %v792 = vsel %vm616, %v791, 0.0
        %793 = vadd.xlane.f32.xlu0 %v792
        %v794 = vpop.xlane.xlu0 %793
        %v795 = vrcp.pop %v794
        %v796 = vmul.f32 %v791, %v795
        %v797 = vpack.c.bf16 %v796, %v796
        %798 = vrot.lane.b32.xlu0 %v736, 56
        %v799 = vpop.permute.xlu0 %798
        %v801 = vsel %vm616, %v797, 0
        %v804 = vsel %vm681, %v799, 0
        %806 = vmatprep.subr.bf16.mxu0 0
        %807 = vmatpush1.bf16.msra.mxu0 0
        %808 = vmatprep.subr.bf16.mxu0 0
        %809 = vmatpush1.bf16.msra.mxu0 0
        %810 = vmatprep.subr.bf16.mxu0 0
        %811 = vmatpush1.bf16.msra.mxu0 0
        %812 = vmatprep.subr.bf16.mxu0 0
        %813 = vmatpush1.bf16.msra.mxu0 0
        %814 = vmatprep.subr.bf16.mxu0 0
        %815 = vmatpush1.bf16.msra.mxu0 0
        %816 = vmatprep.subr.bf16.mxu0 0
        %817 = vmatpush1.bf16.msra.mxu0 0
        %818 = vmatprep.subr.bf16.mxu0 0
        %819 = vmatpush1.bf16.msra.mxu0 0
        %820 = vmatprep.subr.bf16.mxu0 0
        %821 = vmatpush1.bf16.msra.mxu0 %v804
        %822 = vmatprep.subr.bf16.mxu0 0
        %823 = vmatpush2.bf16.msra.mxu0 0
        %824 = vmatprep.subr.bf16.mxu0 0
        %825 = vmatpush2.bf16.msra.mxu0 0
        %826 = vmatprep.subr.bf16.mxu0 0
        %827 = vmatpush2.bf16.msra.mxu0 0
        %828 = vmatprep.subr.bf16.mxu0 0
        %829 = vmatpush2.bf16.msra.mxu0 0
        %830 = vmatprep.subr.bf16.mxu0 0
        %831 = vmatpush2.bf16.msra.mxu0 0
        %832 = vmatprep.subr.bf16.mxu0 0
        %833 = vmatpush2.bf16.msra.mxu0 0
        %834 = vmatprep.subr.bf16.mxu0 0
        %835 = vmatpush2.bf16.msra.mxu0 0
        %836 = vmatprep.subr.bf16.mxu0 0
        %837 = vmatpush2.bf16.msra.mxu0 0
        %838 = vmatprep.mubr.bf16.mxu0 0
        %839 = vmatmul.mubr.bf16.gmra.mxu0 %v801
        %v840 = vpop.f32.mrf.mxu0
        %v841 = vadd.f32 0.0, %v840
        %v842 = vpop.f32.mrf.mxu0
        %v843 = vpop.f32.mrf.mxu0
        %v844 = vpop.f32.mrf.mxu0
        %845 = vdwg.mxu0
        %v846 = vpack.c.bf16 %v841, %v841
        %v848 = vunpack.c.l.b16 %v846
        %v849 = vpack.c.b16 %v848, %v848
        %850 = vrot.lane.b32.xlu0 %v849, 8
        %v851 = vpop.permute.xlu0 %850
        %vm853 = vcmask 126016
        %854 = vst.msk [vmem:[#allocation4] sm:$0xf] %vm853, %v851
        %v855 = vld [vmem:[#allocation3] sm:$0xf]
        %856 = vrot.lane.b32.xlu0 %v731, 112
        %v857 = vpop.permute.xlu0 %856
        %v859 = vunpack.c.l.b16 %v855
        %v860 = vpack.c.b16 %v859, %v859
        %861 = vrot.lane.b32.xlu0 %v860, 80
        %v862 = vpop.permute.xlu0 %861
        %v864 = vsel %vm616, %v857, 0
        %v867 = vsel %vm616, %v862, 0
        %869 = vmatprep.subr.bf16.mxu0 0
        %870 = vmatpush1.bf16.xpose.msra.mxu0 0
        %871 = vmatprep.subr.bf16.mxu0 0
        %872 = vmatpush1.bf16.xpose.msra.mxu0 0
        %873 = vmatprep.subr.bf16.mxu0 0
        %874 = vmatpush1.bf16.xpose.msra.mxu0 0
        %875 = vmatprep.subr.bf16.mxu0 0
        %876 = vmatpush1.bf16.xpose.msra.mxu0 0
        %877 = vmatprep.subr.bf16.mxu0 0
        %878 = vmatpush1.bf16.xpose.msra.mxu0 0
        %879 = vmatprep.subr.bf16.mxu0 0
        %880 = vmatpush1.bf16.xpose.msra.mxu0 0
        %881 = vmatprep.subr.bf16.mxu0 0
        %882 = vmatpush1.bf16.xpose.msra.mxu0 0
        %883 = vmatprep.subr.bf16.mxu0 0
        %884 = vmatpush1.bf16.xpose.msra.mxu0 %v867
        %885 = vmatprep.subr.bf16.mxu0 0
        %886 = vmatpush2.bf16.xpose.msra.mxu0 0
        %887 = vmatprep.subr.bf16.mxu0 0
        %888 = vmatpush2.bf16.xpose.msra.mxu0 0
        %889 = vmatprep.subr.bf16.mxu0 0
        %890 = vmatpush2.bf16.xpose.msra.mxu0 0
        %891 = vmatprep.subr.bf16.mxu0 0
        %892 = vmatpush2.bf16.xpose.msra.mxu0 0
        %893 = vmatprep.subr.bf16.mxu0 0
        %894 = vmatpush2.bf16.xpose.msra.mxu0 0
        %895 = vmatprep.subr.bf16.mxu0 0
        %896 = vmatpush2.bf16.xpose.msra.mxu0 0
        %897 = vmatprep.subr.bf16.mxu0 0
        %898 = vmatpush2.bf16.xpose.msra.mxu0 0
        %899 = vmatprep.subr.bf16.mxu0 0
        %900 = vmatpush2.bf16.xpose.msra.mxu0 0
        %901 = vmatprep.mubr.bf16.mxu0 0
        %902 = vmatmul.mubr.bf16.gmra.mxu0 %v864
        %v903 = vpop.f32.mrf.mxu0
        %v904 = vadd.f32 0.0, %v903
        %v905 = vpop.f32.mrf.mxu0
        %v906 = vpop.f32.mrf.mxu0
        %v907 = vpop.f32.mrf.mxu0
        %908 = vdwg.mxu0
        %v909 = vmul.f32 %v904, 0.35355338
        %v910 = vsel %vm616, %v909, -inf
        %911 = vmax.xlane.f32.xlu0 %v910
        %v912 = vpop.xlane.xlu0 %911
        %v913 = vsub.f32 %v909, %v912
        %v914 = vmul.f32 %v913, 1.442695
        %v915 = vpow.pop %v914
        %v916 = vsel %vm616, %v915, 0.0
        %917 = vadd.xlane.f32.xlu0 %v916
        %v918 = vpop.xlane.xlu0 %917
        %v919 = vrcp.pop %v918
        %v920 = vmul.f32 %v915, %v919
        %v921 = vpack.c.bf16 %v920, %v920
        %922 = vrot.lane.b32.xlu0 %v860, 48
        %v923 = vpop.permute.xlu0 %922
        %v925 = vsel %vm616, %v921, 0
        %v928 = vsel %vm681, %v923, 0
        %930 = vmatprep.subr.bf16.mxu0 0
        %931 = vmatpush1.bf16.msra.mxu0 0
        %932 = vmatprep.subr.bf16.mxu0 0
        %933 = vmatpush1.bf16.msra.mxu0 0
        %934 = vmatprep.subr.bf16.mxu0 0
        %935 = vmatpush1.bf16.msra.mxu0 0
        %936 = vmatprep.subr.bf16.mxu0 0
        %937 = vmatpush1.bf16.msra.mxu0 0
        %938 = vmatprep.subr.bf16.mxu0 0
        %939 = vmatpush1.bf16.msra.mxu0 0
        %940 = vmatprep.subr.bf16.mxu0 0
        %941 = vmatpush1.bf16.msra.mxu0 0
        %942 = vmatprep.subr.bf16.mxu0 0
        %943 = vmatpush1.bf16.msra.mxu0 0
        %944 = vmatprep.subr.bf16.mxu0 0
        %945 = vmatpush1.bf16.msra.mxu0 %v928
        %946 = vmatprep.subr.bf16.mxu0 0
        %947 = vmatpush2.bf16.msra.mxu0 0
        %948 = vmatprep.subr.bf16.mxu0 0
        %949 = vmatpush2.bf16.msra.mxu0 0
        %950 = vmatprep.subr.bf16.mxu0 0
        %951 = vmatpush2.bf16.msra.mxu0 0
        %952 = vmatprep.subr.bf16.mxu0 0
        %953 = vmatpush2.bf16.msra.mxu0 0
        %954 = vmatprep.subr.bf16.mxu0 0
        %955 = vmatpush2.bf16.msra.mxu0 0
        %956 = vmatprep.subr.bf16.mxu0 0
        %957 = vmatpush2.bf16.msra.mxu0 0
        %958 = vmatprep.subr.bf16.mxu0 0
        %959 = vmatpush2.bf16.msra.mxu0 0
        %960 = vmatprep.subr.bf16.mxu0 0
        %961 = vmatpush2.bf16.msra.mxu0 0
        %962 = vmatprep.mubr.bf16.mxu0 0
        %963 = vmatmul.mubr.bf16.gmra.mxu0 %v925
        %v964 = vpop.f32.mrf.mxu0
        %v965 = vadd.f32 0.0, %v964
        %v966 = vpop.f32.mrf.mxu0
        %v967 = vpop.f32.mrf.mxu0
        %v968 = vpop.f32.mrf.mxu0
        %969 = vdwg.mxu0
        %v970 = vpack.c.bf16 %v965, %v965
        %v972 = vunpack.c.l.b16 %v970
        %v973 = vpack.c.b16 %v972, %v972
        %974 = vrot.lane.b32.xlu0 %v973, 16
        %v975 = vpop.permute.xlu0 %974
        %vm977 = vcmask 191616
        %978 = vst.msk [vmem:[#allocation4] sm:$0xf] %vm977, %v975
        %v979 = vld [vmem:[#allocation3] sm:$0xf]
        %980 = vrot.lane.b32.xlu0 %v731, 104
        %v981 = vpop.permute.xlu0 %980
        %v983 = vunpack.c.l.b16 %v979
        %v984 = vpack.c.b16 %v983, %v983
        %985 = vrot.lane.b32.xlu0 %v984, 72
        %v986 = vpop.permute.xlu0 %985
        %v988 = vsel %vm616, %v981, 0
        %v991 = vsel %vm616, %v986, 0
        %993 = vmatprep.subr.bf16.mxu0 0
        %994 = vmatpush1.bf16.xpose.msra.mxu0 0
        %995 = vmatprep.subr.bf16.mxu0 0
        %996 = vmatpush1.bf16.xpose.msra.mxu0 0
        %997 = vmatprep.subr.bf16.mxu0 0
        %998 = vmatpush1.bf16.xpose.msra.mxu0 0
        %999 = vmatprep.subr.bf16.mxu0 0
        %1000 = vmatpush1.bf16.xpose.msra.mxu0 0
        %1001 = vmatprep.subr.bf16.mxu0 0
        %1002 = vmatpush1.bf16.xpose.msra.mxu0 0
        %1003 = vmatprep.subr.bf16.mxu0 0
        %1004 = vmatpush1.bf16.xpose.msra.mxu0 0
        %1005 = vmatprep.subr.bf16.mxu0 0
        %1006 = vmatpush1.bf16.xpose.msra.mxu0 0
        %1007 = vmatprep.subr.bf16.mxu0 0
        %1008 = vmatpush1.bf16.xpose.msra.mxu0 %v991
        %1009 = vmatprep.subr.bf16.mxu0 0
        %1010 = vmatpush2.bf16.xpose.msra.mxu0 0
        %1011 = vmatprep.subr.bf16.mxu0 0
        %1012 = vmatpush2.bf16.xpose.msra.mxu0 0
        %1013 = vmatprep.subr.bf16.mxu0 0
        %1014 = vmatpush2.bf16.xpose.msra.mxu0 0
        %1015 = vmatprep.subr.bf16.mxu0 0
        %1016 = vmatpush2.bf16.xpose.msra.mxu0 0
        %1017 = vmatprep.subr.bf16.mxu0 0
        %1018 = vmatpush2.bf16.xpose.msra.mxu0 0
        %1019 = vmatprep.subr.bf16.mxu0 0
        %1020 = vmatpush2.bf16.xpose.msra.mxu0 0
        %1021 = vmatprep.subr.bf16.mxu0 0
        %1022 = vmatpush2.bf16.xpose.msra.mxu0 0
        %1023 = vmatprep.subr.bf16.mxu0 0
        %1024 = vmatpush2.bf16.xpose.msra.mxu0 0
        %1025 = vmatprep.mubr.bf16.mxu0 0
        %1026 = vmatmul.mubr.bf16.gmra.mxu0 %v988
        %v1027 = vpop.f32.mrf.mxu0
        %v1028 = vadd.f32 0.0, %v1027
        %v1029 = vpop.f32.mrf.mxu0
        %v1030 = vpop.f32.mrf.mxu0
        %v1031 = vpop.f32.mrf.mxu0
        %1032 = vdwg.mxu0
        %v1033 = vmul.f32 %v1028, 0.35355338
        %v1034 = vsel %vm616, %v1033, -inf
        %1035 = vmax.xlane.f32.xlu0 %v1034
        %v1036 = vpop.xlane.xlu0 %1035
        %v1037 = vsub.f32 %v1033, %v1036
        %v1038 = vmul.f32 %v1037, 1.442695
        %v1039 = vpow.pop %v1038
        %v1040 = vsel %vm616, %v1039, 0.0
        %1041 = vadd.xlane.f32.xlu0 %v1040
        %v1042 = vpop.xlane.xlu0 %1041
        %v1043 = vrcp.pop %v1042
        %v1044 = vmul.f32 %v1039, %v1043
        %v1045 = vpack.c.bf16 %v1044, %v1044
        %1046 = vrot.lane.b32.xlu0 %v984, 40
        %v1047 = vpop.permute.xlu0 %1046
        %v1049 = vsel %vm616, %v1045, 0
        %v1052 = vsel %vm681, %v1047, 0
        %1054 = vmatprep.subr.bf16.mxu0 0
        %1055 = vmatpush1.bf16.msra.mxu0 0
        %1056 = vmatprep.subr.bf16.mxu0 0
        %1057 = vmatpush1.bf16.msra.mxu0 0
        %1058 = vmatprep.subr.bf16.mxu0 0
        %1059 = vmatpush1.bf16.msra.mxu0 0
        %1060 = vmatprep.subr.bf16.mxu0 0
        %1061 = vmatpush1.bf16.msra.mxu0 0
        %1062 = vmatprep.subr.bf16.mxu0 0
        %1063 = vmatpush1.bf16.msra.mxu0 0
        %1064 = vmatprep.subr.bf16.mxu0 0
        %1065 = vmatpush1.bf16.msra.mxu0 0
        %1066 = vmatprep.subr.bf16.mxu0 0
        %1067 = vmatpush1.bf16.msra.mxu0 0
        %1068 = vmatprep.subr.bf16.mxu0 0
        %1069 = vmatpush1.bf16.msra.mxu0 %v1052
        %1070 = vmatprep.subr.bf16.mxu0 0
        %1071 = vmatpush2.bf16.msra.mxu0 0
        %1072 = vmatprep.subr.bf16.mxu0 0
        %1073 = vmatpush2.bf16.msra.mxu0 0
        %1074 = vmatprep.subr.bf16.mxu0 0
        %1075 = vmatpush2.bf16.msra.mxu0 0
        %1076 = vmatprep.subr.bf16.mxu0 0
        %1077 = vmatpush2.bf16.msra.mxu0 0
        %1078 = vmatprep.subr.bf16.mxu0 0
        %1079 = vmatpush2.bf16.msra.mxu0 0
        %1080 = vmatprep.subr.bf16.mxu0 0
        %1081 = vmatpush2.bf16.msra.mxu0 0
        %1082 = vmatprep.subr.bf16.mxu0 0
        %1083 = vmatpush2.bf16.msra.mxu0 0
        %1084 = vmatprep.subr.bf16.mxu0 0
        %1085 = vmatpush2.bf16.msra.mxu0 0
        %1086 = vmatprep.mubr.bf16.mxu0 0
        %1087 = vmatmul.mubr.bf16.gmra.mxu0 %v1049
        %v1088 = vpop.f32.mrf.mxu0
        %v1089 = vadd.f32 0.0, %v1088
        %v1090 = vpop.f32.mrf.mxu0
        %v1091 = vpop.f32.mrf.mxu0
        %v1092 = vpop.f32.mrf.mxu0
        %1093 = vdwg.mxu0
        %v1094 = vpack.c.bf16 %v1089, %v1089
        %v1096 = vunpack.c.l.b16 %v1094
        %v1097 = vpack.c.b16 %v1096, %v1096
        %1098 = vrot.lane.b32.xlu0 %v1097, 24
        %v1099 = vpop.permute.xlu0 %1098
        %vm1101 = vcmask 257216
        %1102 = vst.msk [vmem:[#allocation4] sm:$0xf] %vm1101, %v1099
        %v1103 = vld [vmem:[#allocation4] sm:$0xf]
        %v1104 = vld [vmem:[%s474] sm:$0xf]
        %v1105 = vld [vmem:[%s474 + $0x4] sm:$0xf]
        %v1106 = vld [vmem:[%s474 + $0x8] sm:$0xf]
        %v1107 = vld [vmem:[%s474 + $0xc] sm:$0xf]
        %v1108 = vlaneseq
        %v1109 = vshrl.u32 %v1108, 7
        %v1110 = vsub.s32 4, %v1109
        %v1111 = vrot.slane %v502, %v1110
        %v1116 = vunpack.c.l.b16 %v1104
        %v1117 = vunpack.c.l.b16 %v1105
        %v1118 = vunpack.c.l.b16 %v1106
        %v1119 = vunpack.c.l.b16 %v1107
        %v1120 = vpack.c.b16 %v1117, %v1116
        %v1121 = vpack.c.b16 %v1119, %v1118
        %vm1124 = vcmask 261120
        %v1126 = vsel %vm1124, %v1103, 0
        %1128 = vmatprep.subr.bf16.mxu0 0
        %1129 = vmatpush1.bf16.msra.mxu0 0
        %1130 = vmatprep.subr.bf16.mxu0 0
        %1131 = vmatpush1.bf16.msra.mxu0 0
        %1132 = vmatprep.subr.bf16.mxu0 0
        %1133 = vmatpush1.bf16.msra.mxu0 0
        %1134 = vmatprep.subr.bf16.mxu0 0
        %1135 = vmatpush1.bf16.msra.mxu0 0
        %1136 = vmatprep.subr.bf16.mxu0 0
        %1137 = vmatpush1.bf16.msra.mxu0 0
        %1138 = vmatprep.subr.bf16.mxu0 0
        %1139 = vmatpush1.bf16.msra.mxu0 0
        %1140 = vmatprep.subr.bf16.mxu0 0
        %1141 = vmatpush1.bf16.msra.mxu0 %v1121
        %1142 = vmatprep.subr.bf16.mxu0 0
        %1143 = vmatpush1.bf16.msra.mxu0 %v1120
        %1144 = vmatprep.subr.bf16.mxu0 0
        %1145 = vmatpush2.bf16.msra.mxu0 0
        %1146 = vmatprep.subr.bf16.mxu0 0
        %1147 = vmatpush2.bf16.msra.mxu0 0
        %1148 = vmatprep.subr.bf16.mxu0 0
        %1149 = vmatpush2.bf16.msra.mxu0 0
        %1150 = vmatprep.subr.bf16.mxu0 0
        %1151 = vmatpush2.bf16.msra.mxu0 0
        %1152 = vmatprep.subr.bf16.mxu0 0
        %1153 = vmatpush2.bf16.msra.mxu0 0
        %1154 = vmatprep.subr.bf16.mxu0 0
        %1155 = vmatpush2.bf16.msra.mxu0 0
        %1156 = vmatprep.subr.bf16.mxu0 0
        %1157 = vmatpush2.bf16.msra.mxu0 0
        %1158 = vmatprep.subr.bf16.mxu0 0
        %1159 = vmatpush2.bf16.msra.mxu0 0
        %1160 = vmatprep.mubr.bf16.mxu0 0
        %1161 = vmatmul.mubr.bf16.gmra.mxu0 %v1126
        %v1162 = vpop.f32.mrf.mxu0
        %v1163 = vadd.f32 %v1111, %v1162
        %v1164 = vpop.f32.mrf.mxu0
        %v1165 = vpop.f32.mrf.mxu0
        %v1166 = vpop.f32.mrf.mxu0
        %1167 = vdwg.mxu0
        %v1168 = vadd.f32 %v1163, %v604
        %v1169 = vsel %vm1124, %v1168, 0.0
        %1170 = vadd.xlane.f32.xlu0 %v1169
        %v1171 = vpop.xlane.xlu0 %1170
        %v1172 = vrcp.pop 32.0
        %v1173 = vmul.f32 %v1171, %v1172
        %v1174 = vsub.f32 %v1168, %v1173
        %v1175 = vmul.f32 %v1174, %v1174
        %v1176 = vsel %vm1124, %v1175, 0.0
        %1177 = vadd.xlane.f32.xlu0 %v1176
        %v1178 = vpop.xlane.xlu0 %1177
        %v1179 = vmul.f32 %v1178, %v1172
        %v1180 = vadd.f32 %v1179, 1e-06
        %v1181 = vrsqrt.pop %v1180
        %v1182 = vmul.f32 %v1174, %v1181
        %v1183 = vlaneseq
        %v1184 = vshrl.u32 %v1183, 7
        %v1185 = vsub.s32 2, %v1184
        %v1186 = vrot.slane %v502, %v1185
        %v1187 = vmul.f32 %v1182, %v1186
        %v1188 = vlaneseq
        %v1189 = vshrl.u32 %v1188, 7
        %v1190 = vsub.s32 3, %v1189
        %v1191 = vrot.slane %v502, %v1190
        %v1192 = vadd.f32 %v1187, %v1191
        %v1193 = vpack.c.bf16 %v1192, %v1192
        %v1194 = vld [vmem:[%s479] sm:$0xf]
        %v1195 = vld [vmem:[%s479 + $0x4] sm:$0xf]
        %v1196 = vld [vmem:[%s479 + $0x8] sm:$0xf]
        %v1197 = vld [vmem:[%s479 + $0xc] sm:$0xf]
        %v1198 = vld [vmem:[%s482] sm:$0x1]
        %v1200 = vlaneseq
        %v1201 = vshrl.u32 %v1200, 7
        %v1202 = vsub.s32 0, %v1201
        %v1203 = vrot.slane %v1198, %v1202
        %v1209 = vunpack.c.l.b16 %v1194
        %v1210 = vunpack.c.l.b16 %v1195
        %v1211 = vunpack.c.l.b16 %v1196
        %v1212 = vunpack.c.l.b16 %v1197
        %v1213 = vpack.c.b16 %v1210, %v1209
        %v1214 = vpack.c.b16 %v1212, %v1211
        %v1218 = vsel %vm1124, %v1193, 0
        %1220 = vmatprep.subr.bf16.mxu0 0
        %1221 = vmatpush1.bf16.msra.mxu0 0
        %1222 = vmatprep.subr.bf16.mxu0 0
        %1223 = vmatpush1.bf16.msra.mxu0 0
        %1224 = vmatprep.subr.bf16.mxu0 0
        %1225 = vmatpush1.bf16.msra.mxu0 0
        %1226 = vmatprep.subr.bf16.mxu0 0
        %1227 = vmatpush1.bf16.msra.mxu0 0
        %1228 = vmatprep.subr.bf16.mxu0 0
        %1229 = vmatpush1.bf16.msra.mxu0 0
        %1230 = vmatprep.subr.bf16.mxu0 0
        %1231 = vmatpush1.bf16.msra.mxu0 0
        %1232 = vmatprep.subr.bf16.mxu0 0
        %1233 = vmatpush1.bf16.msra.mxu0 %v1214
        %1234 = vmatprep.subr.bf16.mxu0 0
        %1235 = vmatpush1.bf16.msra.mxu0 %v1213
        %1236 = vmatprep.subr.bf16.mxu0 0
        %1237 = vmatpush2.bf16.msra.mxu0 0
        %1238 = vmatprep.subr.bf16.mxu0 0
        %1239 = vmatpush2.bf16.msra.mxu0 0
        %1240 = vmatprep.subr.bf16.mxu0 0
        %1241 = vmatpush2.bf16.msra.mxu0 0
        %1242 = vmatprep.subr.bf16.mxu0 0
        %1243 = vmatpush2.bf16.msra.mxu0 0
        %1244 = vmatprep.subr.bf16.mxu0 0
        %1245 = vmatpush2.bf16.msra.mxu0 0
        %1246 = vmatprep.subr.bf16.mxu0 0
        %1247 = vmatpush2.bf16.msra.mxu0 0
        %1248 = vmatprep.subr.bf16.mxu0 0
        %1249 = vmatpush2.bf16.msra.mxu0 0
        %1250 = vmatprep.subr.bf16.mxu0 0
        %1251 = vmatpush2.bf16.msra.mxu0 0
        %1252 = vmatprep.mubr.bf16.mxu0 0
        %1253 = vmatmul.mubr.bf16.gmra.mxu0 %v1218
        %v1254 = vpop.f32.mrf.mxu0
        %v1255 = vadd.f32 %v1203, %v1254
        %v1256 = vpop.f32.mrf.mxu0
        %v1257 = vpop.f32.mrf.mxu0
        %v1258 = vpop.f32.mrf.mxu0
        %1259 = vdwg.mxu0
        %v1260 = vmul.f32 %v1255, 0.5
        %v1261 = vrcp.pop 1.4142135
        %v1262 = vmul.f32 %v1255, %v1261
        %v1263 = verf.f32.pop %v1262
        %v1264 = vadd.f32 %v1263, 1.0
        %v1265 = vmul.f32 %v1260, %v1264
        %v1266 = vpack.c.bf16 %v1265, %v1265
        %v1267 = vld [vmem:[%s487] sm:$0xf]
        %v1268 = vld [vmem:[%s487 + $0x4] sm:$0xf]
        %v1269 = vld [vmem:[%s487 + $0x8] sm:$0xf]
        %v1270 = vld [vmem:[%s487 + $0xc] sm:$0xf]
        %v1271 = vld [vmem:[%s487 + $0x10] sm:$0xf]
        %v1272 = vld [vmem:[%s487 + $0x14] sm:$0xf]
        %v1273 = vld [vmem:[%s487 + $0x18] sm:$0xf]
        %v1274 = vld [vmem:[%s487 + $0x1c] sm:$0xf]
        %v1275 = vlaneseq
        %v1276 = vshrl.u32 %v1275, 7
        %v1277 = vsub.s32 5, %v1276
        %v1278 = vrot.slane %v502, %v1277
        %v1287 = vunpack.c.l.b16 %v1267
        %v1288 = vunpack.c.l.b16 %v1268
        %v1289 = vunpack.c.l.b16 %v1269
        %v1290 = vunpack.c.l.b16 %v1270
        %v1291 = vunpack.c.l.b16 %v1271
        %v1292 = vunpack.c.l.b16 %v1272
        %v1293 = vunpack.c.l.b16 %v1273
        %v1294 = vunpack.c.l.b16 %v1274
        %v1295 = vpack.c.b16 %v1288, %v1287
        %v1296 = vpack.c.b16 %v1290, %v1289
        %v1297 = vpack.c.b16 %v1292, %v1291
        %v1298 = vpack.c.b16 %v1294, %v1293
        %vm1303 = vcmask 523264
        %v1305 = vsel %vm1303, %v1266, 0
        %1307 = vmatprep.subr.bf16.mxu0 0
        %1308 = vmatpush1.bf16.msra.mxu0 0
        %1309 = vmatprep.subr.bf16.mxu0 0
        %1310 = vmatpush1.bf16.msra.mxu0 0
        %1311 = vmatprep.subr.bf16.mxu0 0
        %1312 = vmatpush1.bf16.msra.mxu0 0
        %1313 = vmatprep.subr.bf16.mxu0 0
        %1314 = vmatpush1.bf16.msra.mxu0 0
        %1315 = vmatprep.subr.bf16.mxu0 0
        %1316 = vmatpush1.bf16.msra.mxu0 %v1298
        %1317 = vmatprep.subr.bf16.mxu0 0
        %1318 = vmatpush1.bf16.msra.mxu0 %v1297
        %1319 = vmatprep.subr.bf16.mxu0 0
        %1320 = vmatpush1.bf16.msra.mxu0 %v1296
        %1321 = vmatprep.subr.bf16.mxu0 0
        %1322 = vmatpush1.bf16.msra.mxu0 %v1295
        %1323 = vmatprep.subr.bf16.mxu0 0
        %1324 = vmatpush2.bf16.msra.mxu0 0
        %1325 = vmatprep.subr.bf16.mxu0 0
        %1326 = vmatpush2.bf16.msra.mxu0 0
        %1327 = vmatprep.subr.bf16.mxu0 0
        %1328 = vmatpush2.bf16.msra.mxu0 0
        %1329 = vmatprep.subr.bf16.mxu0 0
        %1330 = vmatpush2.bf16.msra.mxu0 0
        %1331 = vmatprep.subr.bf16.mxu0 0
        %1332 = vmatpush2.bf16.msra.mxu0 0
        %1333 = vmatprep.subr.bf16.mxu0 0
        %1334 = vmatpush2.bf16.msra.mxu0 0
        %1335 = vmatprep.subr.bf16.mxu0 0
        %1336 = vmatpush2.bf16.msra.mxu0 0
        %1337 = vmatprep.subr.bf16.mxu0 0
        %1338 = vmatpush2.bf16.msra.mxu0 0
        %1339 = vmatprep.mubr.bf16.mxu0 0
        %1340 = vmatmul.mubr.bf16.gmra.mxu0 %v1305
        %v1341 = vpop.f32.mrf.mxu0
        %v1342 = vadd.f32 %v1278, %v1341
        %v1343 = vpop.f32.mrf.mxu0
        %v1344 = vpop.f32.mrf.mxu0
        %v1345 = vpop.f32.mrf.mxu0
        %1346 = vdwg.mxu0
        %v1347 = vadd.f32 %v1342, %v1168
        %1348 = vst.msk [vmem:[%s603] sm:$0xff] %vm1124, %v1347
        %p1349 = scmp.eq.s32.totalorder %s32, 1
        // Predicated region
        $region69: #{tpu_custom_call.1} parent=55 // pred_check
          %p1350 = pneg %p1349
        $region70: #{tpu_custom_call.1} parent=55 // pred_check_branch
          %1352 = sbr.rel (%p1350) target = $region72
        $region71: #{tpu_custom_call.1} parent=55 // pred_region
          %v1353 = vld [vmem:[%s8] sm:$0x1]
          %v1354 = vld [vmem:[%s8 + $0x1] sm:$0x1]
          %v1355 = vsel %vm1124, %v1347, 0.0
          %1356 = vadd.xlane.f32.xlu0 %v1355
          %v1357 = vpop.xlane.xlu0 %1356
          %v1358 = vmul.f32 %v1357, %v1172
          %v1359 = vsub.f32 %v1347, %v1358
          %v1360 = vmul.f32 %v1359, %v1359
          %v1361 = vsel %vm1124, %v1360, 0.0
          %1362 = vadd.xlane.f32.xlu0 %v1361
          %v1363 = vpop.xlane.xlu0 %1362
          %v1364 = vmul.f32 %v1363, %v1172
          %v1365 = vadd.f32 %v1364, 1e-06
          %v1366 = vrsqrt.pop %v1365
          %v1367 = vmul.f32 %v1359, %v1366
          %v1368 = vlaneseq
          %v1369 = vshrl.u32 %v1368, 7
          %v1370 = vsub.s32 0, %v1369
          %v1371 = vrot.slane %v1353, %v1370
          %v1372 = vmul.f32 %v1367, %v1371
          %v1373 = vlaneseq
          %v1374 = vshrl.u32 %v1373, 7
          %v1375 = vsub.s32 0, %v1374
          %v1376 = vrot.slane %v1354, %v1375
          %v1377 = vadd.f32 %v1372, %v1376
          %s1378 = scalar_lea.vmem %s461, %s602 [#allocation8]
          %1379 = vst.msk [vmem:[%s1378] sm:$0xff] %vm1124, %v1377
        $region72: #{tpu_custom_call.1} parent=55 // pred_fallthru
          _
        %s1380 = sand.u32 %s282, 1
        %s1381 = scalar_lea.sflag [#allocation7], %s1380
        %s1382 = sand.u32 %s282, 1
        %s1383 = smul.addr %s1382, 8
        %s1384 = scalar_lea.vmem [#allocation8], %s1383
        // Predicated region
        $region73: #{tpu_custom_call.1} parent=55 // pred_check
          %p1385 = pneg %p292
        $region74: #{tpu_custom_call.1} parent=55 // pred_check_branch
          %1387 = sbr.rel (%p1385) target = $region76
        $region75: #{tpu_custom_call.1} parent=55 // pred_region
          %s1389 = ssub.s32 128, 128
          %1390 = vsyncadd %s1381, %s1389
          %s1391 = smul.addr %s31, 128
          %s1392 = scalar_lea.hbm %s9, %s1391
          %s1394 = sshll.u32 %s1384, 4
          %s1395 = int_to_ptr.vmem [resolvable:$true] %s1394
          %1397 = dma.vmem_to_hbm [thread:$0]  %s1395, 128, %s1392, %s1381
        $region76: #{tpu_custom_call.1} parent=55 // pred_fallthru
          _
      $region56: #{tpu_custom_call.1} parent=5 // pred_fallthru
        _
      %p1398 = scmp.le.s32.totalorder 2, %s21
      // Predicated region
      $region77: #{tpu_custom_call.1} parent=5 // pred_check
        %p1399 = pneg %p1398
      $region78: #{tpu_custom_call.1} parent=5 // pred_check_branch
        %1401 = sbr.rel (%p1399) target = $region80
      $region79: #{tpu_custom_call.1} parent=5 // pred_region
        %s1402 = ssub.s32 %s21, 2
        // Predicated region
        $region81: #{tpu_custom_call.1} parent=79 // pred_check
          %p1403 = pneg %p298
        $region82: #{tpu_custom_call.1} parent=79 // pred_check_branch
          %1405 = sbr.rel (%p1403) target = $region84
        $region83: #{tpu_custom_call.1} parent=79 // pred_region
          %s1406 = sand.u32 %s283, 1
          %s1407 = scalar_lea.sflag [#allocation7], %s1406
          %s1408 = sand.u32 %s283, 1
          %s1409 = smul.addr %s1408, 8
          %s1410 = scalar_lea.vmem [#allocation8], %s1409
          %1411 = dma.done %s1407, 128
        $region84: #{tpu_custom_call.1} parent=79 // pred_fallthru
          _
      $region80: #{tpu_custom_call.1} parent=5 // pred_fallthru
        _
    $region6: #{tpu_custom_call.1} parent=1 // loop_footer
      %s25 = sadd.s32 1, %s21
    $region7: #{tpu_custom_call.1} parent=1 // loop_footer_branch
      %20 = sbr.rel target = $region3
    $region8: #{tpu_custom_call.1} parent=1 // loop_exit
      _
    %1412 = vsyncpa [#allocation6], 1
    %s1413 = scalar_lea.sflag [#allocation6], 1
    %1414 = vsyncpa %s1413, 1
    %1415 = vsyncpa [#allocation7], 1
    %s1416 = scalar_lea.sflag [#allocation7], 1
    %1417 = vsyncpa %s1416, 1

</llo_original>
